<compile_context>
chip_gen: v5e
topology: v5e:2x2
jax: 0.10.0
libtpu: 0.0.40
codegen_flags: <defaults>
</compile_context>

<pallas_src>
import jax
import jax.numpy as jnp
from jax.experimental import pallas as pl
from jax.experimental.pallas import tpu as pltpu


def _round_up(a, b):
    return -(-a // b) * b


# ----------------------------- Pallas kernel --------------------------------

def _cnn_fused_kernel(x_ref, a_ref, v1_ref, b_ref, v2_ref,
                      w1_ref, fb1_ref, w2_ref, fb2_ref, o_ref):
    """Fused CNNMnist forward for one batch tile of TB samples.

    x_ref  : (6*TB, 256) bf16   conv1 LHS built by the wrapper:
                                row i2*TB + n, lane u*32 + s holds
                                x[n, 4*i2 + u, s]  (u=0..7, W padded 28->32)
    a_ref  : (256, 1024) bf16   conv1 banded weights; column block
                                pi*512 + ph*256 + b*128 + (j*10 + c)
    v1_ref : (1, 128)    f32    conv1 bias tiled over j (lanes j*10+c)
    b_ref  : (640, 256)  bf16   conv2 banded weights (ki, j, ci) x (b2, j3, c2)
    v2_ref : (1, 128)    f32    conv2 bias tiled over j3 (lanes j3*20+c2)
    w1_ref : (512, 128)  bf16   fc1 weights, rows permuted to (i3, j3, c2)
    fb1_ref: (1, 128)    f32
    w2_ref : (128, 128)  bf16   fc weights (50x10 block, zero padded)
    fb2_ref: (1, 128)    f32    lanes >= 10 are -1e30 (mask pad logits)
    o_ref  : (TB, 128)   f32    log-probs in lanes 0..9
    """
    TB = o_ref.shape[0]
    f32 = jnp.float32
    bf16 = jnp.bfloat16

    # ---------------- conv1 (5x5, 1->10) + maxpool2 + relu ------------------
    # One matmul against the 4 lane-concatenated banded weight blocks; the two
    # H-pool phases and two W-pool phases are 128-lane-aligned column groups
    # reduced with elementwise max (bias hoisted after the max).
    y = jnp.dot(x_ref[...], a_ref[...], preferred_element_type=f32)  # (6TB, 1024)
    v1 = v1_ref[...]
    h1 = []
    for pi in range(2):                                  # output row parity
        base = pi * 512
        m = jnp.maximum(
            jnp.maximum(y[:, base:base + 128], y[:, base + 128:base + 256]),
            jnp.maximum(y[:, base + 256:base + 384], y[:, base + 384:base + 512]))
        h1.append(jnp.maximum(m + v1, 0.0).astype(bf16))  # (6TB, 128) bf16

    # ---------------- conv2 (5x5, 10->20) + maxpool2 + relu -----------------
    # conv2_drop (Dropout2d) is identity in eval mode.
    # Build the shared LHS once from the 6 distinct row-shift slabs (u=0..5);
    # both H-pool-phase matmuls read 128-lane-aligned slices of it (K=640).
    slabs = []
    for u in range(6):
        par, t0 = u % 2, u // 2
        slabs.append(h1[par][t0 * TB:(t0 + 4) * TB, :])
    lhs2_all = jnp.concatenate(slabs, axis=-1)                    # (4TB, 768) bf16
    Bm = b_ref[...]
    y2a = jnp.dot(lhs2_all[:, :640], Bm, preferred_element_type=f32)   # ph=0
    y2b = jnp.dot(lhs2_all[:, 128:], Bm, preferred_element_type=f32)   # ph=1
    acc2 = jnp.maximum(jnp.maximum(y2a[:, :128], y2a[:, 128:]),
                       jnp.maximum(y2b[:, :128], y2b[:, 128:]))
    h2 = jnp.maximum(acc2 + v2_ref[...], 0.0).astype(bf16)        # (4TB, 128) bf16

    # ---------------- fc1 -> relu -> fc -> log_softmax ----------------------
    flat = jnp.concatenate([h2[i3 * TB:(i3 + 1) * TB, :] for i3 in range(4)],
                           axis=-1)                               # (TB, 512) bf16
    h = jnp.dot(flat, w1_ref[...], preferred_element_type=f32) + fb1_ref[...]
    h = jnp.maximum(h, 0.0)
    # TODO(synk): F.dropout(training=True) / Dropout2d are stochastic; eval
    # (identity) semantics are implemented here.
    z = jnp.dot(h.astype(bf16), w2_ref[...],
                preferred_element_type=f32) + fb2_ref[...]        # (TB, 128) f32
    zmax = jnp.max(z, axis=1, keepdims=True)
    zc = z - zmax
    lse = jnp.log(jnp.sum(jnp.exp(zc), axis=1, keepdims=True))
    o_ref[...] = zc - lse


# ------------------------- parameter packing (XLA, once) --------------------

def pack_params(params):
    w1 = params["conv1_w"].astype(jnp.float32)   # (10, 1, 5, 5)
    cb1 = params["conv1_b"].astype(jnp.float32)  # (10,)
    w2 = params["conv2_w"].astype(jnp.float32)   # (20, 10, 5, 5)
    cb2 = params["conv2_b"].astype(jnp.float32)  # (20,)
    f1w = params["fc1_w"].astype(jnp.float32)    # (50, 320)
    f1b = params["fc1_b"].astype(jnp.float32)    # (50,)
    f2w = params["fc_w"].astype(jnp.float32)     # (10, 50)
    f2b = params["fc_b"].astype(jnp.float32)     # (10,)

    # conv1 banded weights, all 4 (pi, ph) phase blocks lane-concatenated:
    # A[u*32 + s, pi*512 + ph*256 + b*128 + j*10 + c] = w1[c, 0, ki, kj]
    #   with u = 2*pi + ph + ki, s = 2*j + b + kj.
    ki, kj, c, j, b, pi, ph = jnp.meshgrid(
        jnp.arange(5), jnp.arange(5), jnp.arange(10), jnp.arange(12),
        jnp.arange(2), jnp.arange(2), jnp.arange(2), indexing="ij")
    rows = ((2 * pi + ph + ki) * 32 + 2 * j + b + kj).ravel()
    cols = (pi * 512 + ph * 256 + b * 128 + j * 10 + c).ravel()
    A = jnp.zeros((256, 1024), jnp.float32).at[rows, cols].set(
        w1[c, 0, ki, kj].ravel())
    v1 = jnp.pad(jnp.tile(cb1, 12), (0, 8)).reshape(1, 128)

    # conv2 banded weights:
    # B[ki*128 + j*10 + ci, b2*128 + j3*20 + c2] = w2[c2, ci, ki, j-(2j3+b2)]
    ki, kj, ci, c2, j3, b2 = jnp.meshgrid(jnp.arange(5), jnp.arange(5),
                                          jnp.arange(10), jnp.arange(20),
                                          jnp.arange(4), jnp.arange(2),
                                          indexing="ij")
    rows = (ki * 128 + (2 * j3 + b2 + kj) * 10 + ci).ravel()
    cols = (b2 * 128 + j3 * 20 + c2).ravel()
    B = jnp.zeros((640, 256), jnp.float32).at[rows, cols].set(
        w2[c2, ci, ki, kj].ravel())
    v2 = jnp.pad(jnp.tile(cb2, 4), (0, 48)).reshape(1, 128)

    # fc1: permute input rows from PyTorch's NCHW flatten (c2*16 + i3*4 + j3)
    # to the kernel's lane layout (i3*128 + j3*20 + c2), pad lanes to 128.
    i3, j3, c2 = jnp.meshgrid(jnp.arange(4), jnp.arange(4), jnp.arange(20),
                              indexing="ij")
    dst = (i3 * 128 + j3 * 20 + c2).ravel()
    src = (c2 * 16 + i3 * 4 + j3).ravel()
    W1p = jnp.zeros((512, 128), jnp.float32).at[dst].set(
        jnp.pad(f1w.T[src], ((0, 0), (0, 78))))
    fb1 = jnp.pad(f1b, (0, 78)).reshape(1, 128)

    W2p = jnp.zeros((128, 128), jnp.float32).at[:50, :10].set(f2w.T)
    fb2 = jnp.full((128,), -1e30, jnp.float32).at[:10].set(f2b).reshape(1, 128)

    return {"A": A.astype(jnp.bfloat16), "v1": v1,
            "B": B.astype(jnp.bfloat16), "v2": v2,
            "W1p": W1p.astype(jnp.bfloat16), "fb1": fb1,
            "W2p": W2p.astype(jnp.bfloat16), "fb2": fb2}


# ------------------------------ forward wrapper ------------------------------

def _choose_tb(n):
    """Batch tile: >= 2 balanced grid tiles when N > 8 (dual-TC v7x / megacore),
    capped at 256 to amortize per-grid-step overhead without VMEM pressure."""
    if n <= 8:
        return 8
    half = -(-n // 2)
    return min(_round_up(half, 8), 256)


def _prep_input(x_nchw, TB):
    """(N,1,28,28) -> (nt, 6*TB, 256) bf16 conv1 LHS.

    Row i2*TB + n, lane u*32 + s holds x[n, 4*i2 + u, s]  (W zero-padded to 32).
    Rows of the image are duplicated ~1.7x so the kernel needs no lane splicing
    for conv1; the extra HBM traffic (~3 KB/sample) is hidden by pipelining.
    """
    N = x_nchw.shape[0]
    Np = _round_up(N, TB)
    nt = Np // TB
    x = x_nchw.reshape(N, 28, 28).astype(jnp.bfloat16)
    x = jnp.pad(x, ((0, Np - N), (0, 0), (0, 4)))              # (Np, 28, 32)
    h_idx = 4 * jnp.arange(6)[:, None] + jnp.arange(8)[None, :]  # (6, 8)
    xg = x[:, h_idx, :]                                        # (Np, 6, 8, 32)
    xg = xg.reshape(nt, TB, 6, 256)
    xg = jnp.transpose(xg, (0, 2, 1, 3)).reshape(nt, 6 * TB, 256)
    return xg, Np, nt


def cnn_mnist_forward(x_nchw, packed):
    N = x_nchw.shape[0]
    TB = _choose_tb(N)
    xk, Np, nt = _prep_input(x_nchw, TB)

    # Advisory cost hint for XLA's scheduler around the custom call.
    flops = 2 * Np * (6 * 256 * 1024 + 2 * 4 * 640 * 256 + 512 * 128 + 128 * 128)
    weight_bytes = (256 * 1024 + 640 * 256 + 512 * 128 + 128 * 128) * 2 + 4 * 128 * 4
    cost = pl.CostEstimate(
        flops=int(flops),
        transcendentals=int(129 * Np),
        bytes_accessed=int(Np * (6 * 256 * 2 + 128 * 4) + nt * weight_bytes))

    out = pl.pallas_call(
        _cnn_fused_kernel,
        out_shape=jax.ShapeDtypeStruct((Np, 128), jnp.float32),
        grid=(nt,),
        in_specs=[
            pl.BlockSpec((None, 6 * TB, 256), lambda i: (i, 0, 0)),  # conv1 LHS
            pl.BlockSpec((256, 1024), lambda i: (0, 0)),             # A (conv1 W)
            pl.BlockSpec((1, 128), lambda i: (0, 0)),                # v1
            pl.BlockSpec((640, 256), lambda i: (0, 0)),              # B (conv2 W)
            pl.BlockSpec((1, 128), lambda i: (0, 0)),                # v2
            pl.BlockSpec((512, 128), lambda i: (0, 0)),              # W1p
            pl.BlockSpec((1, 128), lambda i: (0, 0)),                # fb1
            pl.BlockSpec((128, 128), lambda i: (0, 0)),              # W2p
            pl.BlockSpec((1, 128), lambda i: (0, 0)),                # fb2
        ],
        out_specs=pl.BlockSpec((TB, 128), lambda i: (i, 0)),
        compiler_params=pltpu.CompilerParams(
            dimension_semantics=("parallel",),
            vmem_limit_bytes=32 * 1024 * 1024),
        cost_estimate=cost,
    )(xk, packed["A"], packed["v1"], packed["B"], packed["v2"],
      packed["W1p"], packed["fb1"], packed["W2p"], packed["fb2"])

    return out[:N, :10]


# --------------------------- reference (pure JAX) ----------------------------

def reference_forward(x_nchw, params):
    def conv(x, w, b):
        y = jax.lax.conv_general_dilated(
            x, w, (1, 1), "VALID",
            dimension_numbers=("NCHW", "OIHW", "NCHW"))
        return y + b.reshape(1, -1, 1, 1)

    def pool(x):
        return jax.lax.reduce_window(x, -jnp.inf, jax.lax.max,
                                     (1, 1, 2, 2), (1, 1, 2, 2), "VALID")

    x = x_nchw.astype(jnp.float32)
    h = jnp.maximum(pool(conv(x, params["conv1_w"], params["conv1_b"])), 0.0)
    h = jnp.maximum(pool(conv(h, params["conv2_w"], params["conv2_b"])), 0.0)
    flat = h.reshape(h.shape[0], -1)
    h = jnp.maximum(flat @ params["fc1_w"].T + params["fc1_b"], 0.0)
    z = h @ params["fc_w"].T + params["fc_b"]
    return jax.nn.log_softmax(z, axis=1)


# ------------------------------ param init -----------------------------------

def init_params(key):
    def uinit(k, shape, fan_in):
        bound = 1.0 / float(fan_in) ** 0.5
        return jax.random.uniform(k, shape, jnp.float32, -bound, bound)

    ks = jax.random.split(key, 8)
    return {
        "conv1_w": uinit(ks[0], (10, 1, 5, 5), 1 * 5 * 5),
        "conv1_b": uinit(ks[1], (10,), 1 * 5 * 5),
        "conv2_w": uinit(ks[2], (20, 10, 5, 5), 10 * 5 * 5),
        "conv2_b": uinit(ks[3], (20,), 10 * 5 * 5),
        "fc1_w": uinit(ks[4], (50, 320), 320),
        "fc1_b": uinit(ks[5], (50,), 320),
        "fc_w": uinit(ks[6], (10, 50), 50),
        "fc_b": uinit(ks[7], (10,), 50),
    }


if __name__ == "__main__":
    key = jax.random.PRNGKey(0)
    pkey, xkey, xkey2 = jax.random.split(key, 3)
    params = init_params(pkey)
    packed = pack_params(params)

    fwd = jax.jit(cnn_mnist_forward)
    ref_fwd = jax.jit(reference_forward)

    # Small batch (MNIST-shaped input: 28x28 is required by fc1's 320 = 20*4*4).
    x = jax.random.normal(xkey, (4, 1, 28, 28), dtype=jnp.float32)
    out = jax.block_until_ready(fwd(x, packed))
    assert out.shape == (4, 10), out.shape
    ref = jax.block_until_ready(ref_fwd(x, params))
    assert jnp.allclose(out, ref, atol=2e-2, rtol=2e-2), (
        "max abs diff %r" % float(jnp.max(jnp.abs(out - ref))))

    # Larger batch: exercises the multi-tile batch grid (TB=72, 2 balanced
    # tiles) and batch padding.
    x2 = jax.random.normal(xkey2, (136, 1, 28, 28), dtype=jnp.float32)
    out2 = jax.block_until_ready(fwd(x2, packed))
    assert out2.shape == (136, 10), out2.shape
    ref2 = jax.block_until_ready(ref_fwd(x2, params))
    assert jnp.allclose(out2, ref2, atol=2e-2, rtol=2e-2), (
        "max abs diff %r" % float(jnp.max(jnp.abs(out2 - ref2))))

    print("KERNEL_OK")
</pallas_src>

<mosaic_0001>
module attributes {stable_mosaic.version = 11 : i64} {
  func.func @_cnn_fused_kernel(%arg0: i32, %arg1: memref<1x48x256xbf16, #tpu.memory_space<vmem>>, %arg2: memref<256x1024xbf16, #tpu.memory_space<vmem>>, %arg3: memref<1x128xf32, #tpu.memory_space<vmem>>, %arg4: memref<640x256xbf16, #tpu.memory_space<vmem>>, %arg5: memref<1x128xf32, #tpu.memory_space<vmem>>, %arg6: memref<512x128xbf16, #tpu.memory_space<vmem>>, %arg7: memref<1x128xf32, #tpu.memory_space<vmem>>, %arg8: memref<128x128xbf16, #tpu.memory_space<vmem>>, %arg9: memref<1x128xf32, #tpu.memory_space<vmem>>, %arg10: memref<8x128xf32, #tpu.memory_space<vmem>>) attributes {dimension_semantics = [#tpu.dimension_semantics<parallel>], iteration_bounds = array<i64: 1>, scalar_prefetch = 0 : i64, scratch_operands = 0 : i64, tpu.core_type = #tpu.core_type<tc>, window_params = [{transform_indices = @transform_0, window_bounds = array<i64: 1, 48, 256>}, {pipeline_mode = #tpu.pipeline_mode<synchronous>, transform_indices = @transform_1, window_bounds = array<i64: 256, 1024>}, {pipeline_mode = #tpu.pipeline_mode<synchronous>, transform_indices = @transform_2, window_bounds = array<i64: 1, 128>}, {pipeline_mode = #tpu.pipeline_mode<synchronous>, transform_indices = @transform_3, window_bounds = array<i64: 640, 256>}, {pipeline_mode = #tpu.pipeline_mode<synchronous>, transform_indices = @transform_4, window_bounds = array<i64: 1, 128>}, {pipeline_mode = #tpu.pipeline_mode<synchronous>, transform_indices = @transform_5, window_bounds = array<i64: 512, 128>}, {pipeline_mode = #tpu.pipeline_mode<synchronous>, transform_indices = @transform_6, window_bounds = array<i64: 1, 128>}, {pipeline_mode = #tpu.pipeline_mode<synchronous>, transform_indices = @transform_7, window_bounds = array<i64: 128, 128>}, {pipeline_mode = #tpu.pipeline_mode<synchronous>, transform_indices = @transform_8, window_bounds = array<i64: 1, 128>}, {transform_indices = @transform_9, window_bounds = array<i64: 8, 128>}]} {
    %c0 = arith.constant 0 : index
    %c0_0 = arith.constant 0 : index
    %c0_1 = arith.constant 0 : index
    %0 = vector.load %arg1[%c0, %c0_0, %c0_1] : memref<1x48x256xbf16, #tpu.memory_space<vmem>>, vector<1x48x256xbf16>
    %1 = vector.shape_cast %0 : vector<1x48x256xbf16> to vector<48x256xbf16>
    %c0_2 = arith.constant 0 : index
    %c0_3 = arith.constant 0 : index
    %2 = vector.load %arg2[%c0_2, %c0_3] : memref<256x1024xbf16, #tpu.memory_space<vmem>>, vector<256x1024xbf16>
    %cst = arith.constant dense<0.000000e+00> : vector<48x1024xf32>
    %3 = tpu.matmul %1, %2, %cst {dimension_numbers = #tpu.dot_dimension_numbers<[1], [0], [0], [1], [0, 0, 1, 1], [], []>} : vector<48x256xbf16>, vector<256x1024xbf16>, vector<48x1024xf32> -> vector<48x1024xf32>
    %c0_4 = arith.constant 0 : index
    %c0_5 = arith.constant 0 : index
    %4 = vector.load %arg3[%c0_4, %c0_5] : memref<1x128xf32, #tpu.memory_space<vmem>>, vector<1x128xf32>
    %5 = vector.extract_strided_slice %3 {offsets = [0, 0], sizes = [48, 128], strides = [1, 1]} : vector<48x1024xf32> to vector<48x128xf32>
    %6 = vector.extract_strided_slice %3 {offsets = [0, 128], sizes = [48, 128], strides = [1, 1]} : vector<48x1024xf32> to vector<48x128xf32>
    %7 = arith.maximumf %5, %6 : vector<48x128xf32>
    %8 = vector.extract_strided_slice %3 {offsets = [0, 256], sizes = [48, 128], strides = [1, 1]} : vector<48x1024xf32> to vector<48x128xf32>
    %9 = vector.extract_strided_slice %3 {offsets = [0, 384], sizes = [48, 128], strides = [1, 1]} : vector<48x1024xf32> to vector<48x128xf32>
    %10 = arith.maximumf %8, %9 : vector<48x128xf32>
    %11 = arith.maximumf %7, %10 : vector<48x128xf32>
    %12 = vector.broadcast %4 : vector<1x128xf32> to vector<48x128xf32>
    %13 = arith.addf %11, %12 : vector<48x128xf32>
    %cst_6 = arith.constant 0.000000e+00 : f32
    %14 = vector.broadcast %cst_6 : f32 to vector<48x128xf32>
    %15 = arith.maximumf %13, %14 : vector<48x128xf32>
    %16 = arith.truncf %15 : vector<48x128xf32> to vector<48x128xbf16>
    %17 = vector.extract_strided_slice %3 {offsets = [0, 512], sizes = [48, 128], strides = [1, 1]} : vector<48x1024xf32> to vector<48x128xf32>
    %18 = vector.extract_strided_slice %3 {offsets = [0, 640], sizes = [48, 128], strides = [1, 1]} : vector<48x1024xf32> to vector<48x128xf32>
    %19 = arith.maximumf %17, %18 : vector<48x128xf32>
    %20 = vector.extract_strided_slice %3 {offsets = [0, 768], sizes = [48, 128], strides = [1, 1]} : vector<48x1024xf32> to vector<48x128xf32>
    %21 = vector.extract_strided_slice %3 {offsets = [0, 896], sizes = [48, 128], strides = [1, 1]} : vector<48x1024xf32> to vector<48x128xf32>
    %22 = arith.maximumf %20, %21 : vector<48x128xf32>
    %23 = arith.maximumf %19, %22 : vector<48x128xf32>
    %24 = vector.broadcast %4 : vector<1x128xf32> to vector<48x128xf32>
    %25 = arith.addf %23, %24 : vector<48x128xf32>
    %cst_7 = arith.constant 0.000000e+00 : f32
    %26 = vector.broadcast %cst_7 : f32 to vector<48x128xf32>
    %27 = arith.maximumf %25, %26 : vector<48x128xf32>
    %28 = arith.truncf %27 : vector<48x128xf32> to vector<48x128xbf16>
    %29 = vector.extract_strided_slice %16 {offsets = [0, 0], sizes = [32, 128], strides = [1, 1]} : vector<48x128xbf16> to vector<32x128xbf16>
    %30 = vector.extract_strided_slice %28 {offsets = [0, 0], sizes = [32, 128], strides = [1, 1]} : vector<48x128xbf16> to vector<32x128xbf16>
    %31 = vector.extract_strided_slice %16 {offsets = [8, 0], sizes = [32, 128], strides = [1, 1]} : vector<48x128xbf16> to vector<32x128xbf16>
    %32 = vector.extract_strided_slice %28 {offsets = [8, 0], sizes = [32, 128], strides = [1, 1]} : vector<48x128xbf16> to vector<32x128xbf16>
    %33 = vector.extract_strided_slice %16 {offsets = [16, 0], sizes = [32, 128], strides = [1, 1]} : vector<48x128xbf16> to vector<32x128xbf16>
    %34 = vector.extract_strided_slice %28 {offsets = [16, 0], sizes = [32, 128], strides = [1, 1]} : vector<48x128xbf16> to vector<32x128xbf16>
    %35 = tpu.concatenate %29, %30, %31, %32, %33, %34 in 1 : vector<32x128xbf16>, vector<32x128xbf16>, vector<32x128xbf16>, vector<32x128xbf16>, vector<32x128xbf16>, vector<32x128xbf16> -> vector<32x768xbf16>
    %c0_8 = arith.constant 0 : index
    %c0_9 = arith.constant 0 : index
    %36 = vector.load %arg4[%c0_8, %c0_9] : memref<640x256xbf16, #tpu.memory_space<vmem>>, vector<640x256xbf16>
    %37 = vector.extract_strided_slice %35 {offsets = [0, 0], sizes = [32, 640], strides = [1, 1]} : vector<32x768xbf16> to vector<32x640xbf16>
    %cst_10 = arith.constant dense<0.000000e+00> : vector<32x256xf32>
    %38 = tpu.matmul %37, %36, %cst_10 {dimension_numbers = #tpu.dot_dimension_numbers<[1], [0], [0], [1], [0, 0, 1, 1], [], []>} : vector<32x640xbf16>, vector<640x256xbf16>, vector<32x256xf32> -> vector<32x256xf32>
    %39 = vector.extract_strided_slice %35 {offsets = [0, 128], sizes = [32, 640], strides = [1, 1]} : vector<32x768xbf16> to vector<32x640xbf16>
    %cst_11 = arith.constant dense<0.000000e+00> : vector<32x256xf32>
    %40 = tpu.matmul %39, %36, %cst_11 {dimension_numbers = #tpu.dot_dimension_numbers<[1], [0], [0], [1], [0, 0, 1, 1], [], []>} : vector<32x640xbf16>, vector<640x256xbf16>, vector<32x256xf32> -> vector<32x256xf32>
    %41 = vector.extract_strided_slice %38 {offsets = [0, 0], sizes = [32, 128], strides = [1, 1]} : vector<32x256xf32> to vector<32x128xf32>
    %42 = vector.extract_strided_slice %38 {offsets = [0, 128], sizes = [32, 128], strides = [1, 1]} : vector<32x256xf32> to vector<32x128xf32>
    %43 = arith.maximumf %41, %42 : vector<32x128xf32>
    %44 = vector.extract_strided_slice %40 {offsets = [0, 0], sizes = [32, 128], strides = [1, 1]} : vector<32x256xf32> to vector<32x128xf32>
    %45 = vector.extract_strided_slice %40 {offsets = [0, 128], sizes = [32, 128], strides = [1, 1]} : vector<32x256xf32> to vector<32x128xf32>
    %46 = arith.maximumf %44, %45 : vector<32x128xf32>
    %47 = arith.maximumf %43, %46 : vector<32x128xf32>
    %c0_12 = arith.constant 0 : index
    %c0_13 = arith.constant 0 : index
    %48 = vector.load %arg5[%c0_12, %c0_13] : memref<1x128xf32, #tpu.memory_space<vmem>>, vector<1x128xf32>
    %49 = vector.broadcast %48 : vector<1x128xf32> to vector<32x128xf32>
    %50 = arith.addf %47, %49 : vector<32x128xf32>
    %cst_14 = arith.constant 0.000000e+00 : f32
    %51 = vector.broadcast %cst_14 : f32 to vector<32x128xf32>
    %52 = arith.maximumf %50, %51 : vector<32x128xf32>
    %53 = arith.truncf %52 : vector<32x128xf32> to vector<32x128xbf16>
    %54 = vector.extract_strided_slice %53 {offsets = [0, 0], sizes = [8, 128], strides = [1, 1]} : vector<32x128xbf16> to vector<8x128xbf16>
    %55 = vector.extract_strided_slice %53 {offsets = [8, 0], sizes = [8, 128], strides = [1, 1]} : vector<32x128xbf16> to vector<8x128xbf16>
    %56 = vector.extract_strided_slice %53 {offsets = [16, 0], sizes = [8, 128], strides = [1, 1]} : vector<32x128xbf16> to vector<8x128xbf16>
    %57 = vector.extract_strided_slice %53 {offsets = [24, 0], sizes = [8, 128], strides = [1, 1]} : vector<32x128xbf16> to vector<8x128xbf16>
    %58 = tpu.concatenate %54, %55, %56, %57 in 1 : vector<8x128xbf16>, vector<8x128xbf16>, vector<8x128xbf16>, vector<8x128xbf16> -> vector<8x512xbf16>
    %c0_15 = arith.constant 0 : index
    %c0_16 = arith.constant 0 : index
    %59 = vector.load %arg6[%c0_15, %c0_16] : memref<512x128xbf16, #tpu.memory_space<vmem>>, vector<512x128xbf16>
    %cst_17 = arith.constant dense<0.000000e+00> : vector<8x128xf32>
    %60 = tpu.matmul %58, %59, %cst_17 {dimension_numbers = #tpu.dot_dimension_numbers<[1], [0], [0], [1], [0, 0, 1, 1], [], []>} : vector<8x512xbf16>, vector<512x128xbf16>, vector<8x128xf32> -> vector<8x128xf32>
    %c0_18 = arith.constant 0 : index
    %c0_19 = arith.constant 0 : index
    %61 = vector.load %arg7[%c0_18, %c0_19] : memref<1x128xf32, #tpu.memory_space<vmem>>, vector<1x128xf32>
    %62 = vector.broadcast %61 : vector<1x128xf32> to vector<8x128xf32>
    %63 = arith.addf %60, %62 : vector<8x128xf32>
    %cst_20 = arith.constant 0.000000e+00 : f32
    %64 = vector.broadcast %cst_20 : f32 to vector<8x128xf32>
    %65 = arith.maximumf %63, %64 : vector<8x128xf32>
    %66 = arith.truncf %65 : vector<8x128xf32> to vector<8x128xbf16>
    %c0_21 = arith.constant 0 : index
    %c0_22 = arith.constant 0 : index
    %67 = vector.load %arg8[%c0_21, %c0_22] : memref<128x128xbf16, #tpu.memory_space<vmem>>, vector<128x128xbf16>
    %cst_23 = arith.constant dense<0.000000e+00> : vector<8x128xf32>
    %68 = tpu.matmul %66, %67, %cst_23 {dimension_numbers = #tpu.dot_dimension_numbers<[1], [0], [0], [1], [0, 0, 1, 1], [], []>} : vector<8x128xbf16>, vector<128x128xbf16>, vector<8x128xf32> -> vector<8x128xf32>
    %c0_24 = arith.constant 0 : index
    %c0_25 = arith.constant 0 : index
    %69 = vector.load %arg9[%c0_24, %c0_25] : memref<1x128xf32, #tpu.memory_space<vmem>>, vector<1x128xf32>
    %70 = vector.broadcast %69 : vector<1x128xf32> to vector<8x128xf32>
    %71 = arith.addf %68, %70 : vector<8x128xf32>
    %cst_26 = arith.constant dense<0xFF800000> : vector<8xf32>
    %72 = vector.multi_reduction <maximumf>, %71, %cst_26 [1] : vector<8x128xf32> to vector<8xf32>
    %73 = vector.shape_cast %72 : vector<8xf32> to vector<8x1xf32>
    %74 = vector.broadcast %73 : vector<8x1xf32> to vector<8x128xf32>
    %75 = arith.subf %71, %74 : vector<8x128xf32>
    %76 = math.exp %75 : vector<8x128xf32>
    %cst_27 = arith.constant dense<0.000000e+00> : vector<8xf32>
    %77 = vector.multi_reduction <add>, %76, %cst_27 [1] : vector<8x128xf32> to vector<8xf32>
    %78 = vector.shape_cast %77 : vector<8xf32> to vector<8x1xf32>
    %79 = math.log %78 : vector<8x1xf32>
    %80 = vector.broadcast %79 : vector<8x1xf32> to vector<8x128xf32>
    %81 = arith.subf %75, %80 : vector<8x128xf32>
    %c0_28 = arith.constant 0 : index
    %c0_29 = arith.constant 0 : index
    %82 = vector.load %arg10[%c0_28, %c0_29] : memref<8x128xf32, #tpu.memory_space<vmem>>, vector<8x128xf32>
    tpu.vector_store %arg10[%c0_28, %c0_29], %81 {strides = array<i32>} : memref<8x128xf32, #tpu.memory_space<vmem>>, vector<8x128xf32>,
    return
  }
  func.func @transform_0(%arg0: i32) -> (i32, i32, i32) {
    %c0_i32 = arith.constant 0 : i32
    %c0_i32_0 = arith.constant 0 : i32
    %c0_i32_1 = arith.constant 0 : i32
    return %arg0, %c0_i32, %c0_i32_0 : i32, i32, i32
  }
  func.func @transform_1(%arg0: i32) -> (i32, i32) {
    %c0_i32 = arith.constant 0 : i32
    %c0_i32_0 = arith.constant 0 : i32
    %c0_i32_1 = arith.constant 0 : i32
    return %c0_i32, %c0_i32_0 : i32, i32
  }
  func.func @transform_2(%arg0: i32) -> (i32, i32) {
    %c0_i32 = arith.constant 0 : i32
    %c0_i32_0 = arith.constant 0 : i32
    %c0_i32_1 = arith.constant 0 : i32
    return %c0_i32, %c0_i32_0 : i32, i32
  }
  func.func @transform_3(%arg0: i32) -> (i32, i32) {
    %c0_i32 = arith.constant 0 : i32
    %c0_i32_0 = arith.constant 0 : i32
    %c0_i32_1 = arith.constant 0 : i32
    return %c0_i32, %c0_i32_0 : i32, i32
  }
  func.func @transform_4(%arg0: i32) -> (i32, i32) {
    %c0_i32 = arith.constant 0 : i32
    %c0_i32_0 = arith.constant 0 : i32
    %c0_i32_1 = arith.constant 0 : i32
    return %c0_i32, %c0_i32_0 : i32, i32
  }
  func.func @transform_5(%arg0: i32) -> (i32, i32) {
    %c0_i32 = arith.constant 0 : i32
    %c0_i32_0 = arith.constant 0 : i32
    %c0_i32_1 = arith.constant 0 : i32
    return %c0_i32, %c0_i32_0 : i32, i32
  }
  func.func @transform_6(%arg0: i32) -> (i32, i32) {
    %c0_i32 = arith.constant 0 : i32
    %c0_i32_0 = arith.constant 0 : i32
    %c0_i32_1 = arith.constant 0 : i32
    return %c0_i32, %c0_i32_0 : i32, i32
  }
  func.func @transform_7(%arg0: i32) -> (i32, i32) {
    %c0_i32 = arith.constant 0 : i32
    %c0_i32_0 = arith.constant 0 : i32
    %c0_i32_1 = arith.constant 0 : i32
    return %c0_i32, %c0_i32_0 : i32, i32
  }
  func.func @transform_8(%arg0: i32) -> (i32, i32) {
    %c0_i32 = arith.constant 0 : i32
    %c0_i32_0 = arith.constant 0 : i32
    %c0_i32_1 = arith.constant 0 : i32
    return %c0_i32, %c0_i32_0 : i32, i32
  }
  func.func @transform_9(%arg0: i32) -> (i32, i32) {
    %c0_i32 = arith.constant 0 : i32
    %c0_i32_0 = arith.constant 0 : i32
    return %arg0, %c0_i32 : i32, i32
  }
}

</mosaic_0001>

<llo_original>
// kernel: cnn_mnist_forward.1
$region0: #{cnn_mnist_forward.1}
  #allocation0 [shape = 'u32[]', space=smem, size = 0x4, offset = 0x4, fixed_abs, tag = 'smem constant byte address 0x4 - core index']
  #allocation1 [shape = 'u32[72,128]{1,0:T(1,128)}', space=vmem, size = 0x9000, scoped, tag = 'internal scratch']
  %s0 = inlined_call_operand.vmem [shape: bf16[1,48,256], index: 0, kind: input, shape index: {}]
  %s1 = inlined_call_operand.vmem [shape: bf16[256,1024], index: 1, kind: input, shape index: {}]
  %s2 = inlined_call_operand.vmem [shape: f32[1,128], index: 2, kind: input, shape index: {}]
  %s3 = inlined_call_operand.hbm [shape: bf16[640,256], index: 3, kind: input, shape index: {}]
  %s4 = inlined_call_operand.vmem [shape: f32[1,128], index: 4, kind: input, shape index: {}]
  %s5 = inlined_call_operand.vmem [shape: bf16[512,128], index: 5, kind: input, shape index: {}]
  %s6 = inlined_call_operand.hbm [shape: f32[1,128], index: 6, kind: input, shape index: {}]
  %s7 = inlined_call_operand.vmem [shape: bf16[128,128], index: 7, kind: input, shape index: {}]
  %s8 = inlined_call_operand.hbm [shape: f32[1,128], index: 8, kind: input, shape index: {}]
  %s9 = inlined_call_operand.vmem [shape: f32[8,128], index: 9, kind: output, shape index: {}]
  %s10 = sld [smem:[#allocation0]]
  $region58: #{cnn_mnist_forward.1} parent=0
    _
  %s12 = ssub.s32 1, %s10
  %s13 = scalar_select 0, %s12, %s10
  $region1: #{cnn_mnist_forward.1} parent=0
    #allocation2 [shape = 'u8[327680]{0}', space=vmem, size = 0x50000, scoped, tag = 'input window, operand 3, single buffered']
    #allocation3 [shape = 's32[1]{0}', space=sflag, size = 0x4, scoped, tag = 'scoped memory for cnn_mnist_forward.1']
    #allocation4 [shape = 'u8[512]{0}', space=vmem, size = 0x400, scoped, tag = 'input window, operand 6, single buffered']
    #allocation5 [shape = 's32[1]{0}', space=sflag, size = 0x4, scoped, tag = 'scoped memory for cnn_mnist_forward.1']
    #allocation6 [shape = 'u8[512]{0}', space=vmem, size = 0x400, scoped, tag = 'input window, operand 8, single buffered']
    %14 = vsyncpa [#allocation3], 0
    %15 = vsyncpa [#allocation5], 0
    // Predicated region
    $region2: #{cnn_mnist_forward.1} parent=1 // pred_check
      _
    $region3: #{cnn_mnist_forward.1} parent=1 // pred_check_branch
      %17 = sbr.rel (0) target = $region5
    $region4: #{cnn_mnist_forward.1} parent=1 // pred_region
      _
    $region5: #{cnn_mnist_forward.1} parent=1 // pred_fallthru
      _
    // Predicated region
    $region6: #{cnn_mnist_forward.1} parent=1 // pred_check
      _
    $region7: #{cnn_mnist_forward.1} parent=1 // pred_check_branch
      %19 = sbr.rel (0) target = $region9
    $region8: #{cnn_mnist_forward.1} parent=1 // pred_region
      _
    $region9: #{cnn_mnist_forward.1} parent=1 // pred_fallthru
      _
    // Predicated region
    $region10: #{cnn_mnist_forward.1} parent=1 // pred_check
      _
    $region11: #{cnn_mnist_forward.1} parent=1 // pred_check_branch
      %21 = sbr.rel (0) target = $region13
    $region12: #{cnn_mnist_forward.1} parent=1 // pred_region
      _
    $region13: #{cnn_mnist_forward.1} parent=1 // pred_fallthru
      _
    // Predicated region
    $region14: #{cnn_mnist_forward.1} parent=1 // pred_check
      _
    $region15: #{cnn_mnist_forward.1} parent=1 // pred_check_branch
      %23 = sbr.rel (0) target = $region17
    $region16: #{cnn_mnist_forward.1} parent=1 // pred_region
      %25 = vsyncadd [#allocation3], 0
      %s26 = sshll.u32 %s3, 4
      %s27 = int_to_ptr.hbm [resolvable:$true] %s26
      %s28 = sshll.u32 [#allocation2], 4
      %s29 = int_to_ptr.vmem [resolvable:$true] %s28
      %34 = dma.hbm_to_vmem [thread:$0]  %s27, 10240, %s29, [#allocation3], 128, 128, 8
    $region17: #{cnn_mnist_forward.1} parent=1 // pred_fallthru
      _
    // Predicated region
    $region18: #{cnn_mnist_forward.1} parent=1 // pred_check
      _
    $region19: #{cnn_mnist_forward.1} parent=1 // pred_check_branch
      %36 = sbr.rel (0) target = $region21
    $region20: #{cnn_mnist_forward.1} parent=1 // pred_region
      _
    $region21: #{cnn_mnist_forward.1} parent=1 // pred_fallthru
      _
    // Predicated region
    $region22: #{cnn_mnist_forward.1} parent=1 // pred_check
      _
    $region23: #{cnn_mnist_forward.1} parent=1 // pred_check_branch
      %38 = sbr.rel (0) target = $region25
    $region24: #{cnn_mnist_forward.1} parent=1 // pred_region
      _
    $region25: #{cnn_mnist_forward.1} parent=1 // pred_fallthru
      _
    // Predicated region
    $region26: #{cnn_mnist_forward.1} parent=1 // pred_check
      _
    $region27: #{cnn_mnist_forward.1} parent=1 // pred_check_branch
      %40 = sbr.rel (0) target = $region29
    $region28: #{cnn_mnist_forward.1} parent=1 // pred_region
      %42 = vsyncadd [#allocation5], 0
      %s44 = sshll.u32 %s6, 4
      %s45 = int_to_ptr.hbm [resolvable:$true] %s44
      %s46 = sshll.u32 [#allocation4], 4
      %s47 = int_to_ptr.vmem [resolvable:$true] %s46
      %49 = dma.hbm_to_vmem [thread:$0]  %s45, 16, %s47, [#allocation5]
    $region29: #{cnn_mnist_forward.1} parent=1 // pred_fallthru
      _
    // Predicated region
    $region30: #{cnn_mnist_forward.1} parent=1 // pred_check
      _
    $region31: #{cnn_mnist_forward.1} parent=1 // pred_check_branch
      %51 = sbr.rel (0) target = $region33
    $region32: #{cnn_mnist_forward.1} parent=1 // pred_region
      _
    $region33: #{cnn_mnist_forward.1} parent=1 // pred_fallthru
      _
    // Predicated region
    $region34: #{cnn_mnist_forward.1} parent=1 // pred_check
      _
    $region35: #{cnn_mnist_forward.1} parent=1 // pred_check_branch
      %53 = sbr.rel (0) target = $region37
    $region36: #{cnn_mnist_forward.1} parent=1 // pred_region
      %55 = vsyncadd [#allocation5], 0
      %s57 = sshll.u32 %s8, 4
      %s58 = int_to_ptr.hbm [resolvable:$true] %s57
      %s59 = sshll.u32 [#allocation6], 4
      %s60 = int_to_ptr.vmem [resolvable:$true] %s59
      %62 = dma.hbm_to_vmem [thread:$0]  %s58, 16, %s60, [#allocation5]
    $region37: #{cnn_mnist_forward.1} parent=1 // pred_fallthru
      _
    // Predicated region
    $region38: #{cnn_mnist_forward.1} parent=1 // pred_check
      _
    $region39: #{cnn_mnist_forward.1} parent=1 // pred_check_branch
      %64 = sbr.rel (0) target = $region41
    $region40: #{cnn_mnist_forward.1} parent=1 // pred_region
      %66 = dma.done [#allocation3], 10240
    $region41: #{cnn_mnist_forward.1} parent=1 // pred_fallthru
      _
    // Predicated region
    $region42: #{cnn_mnist_forward.1} parent=1 // pred_check
      _
    $region43: #{cnn_mnist_forward.1} parent=1 // pred_check_branch
      %68 = sbr.rel (0) target = $region45
    $region44: #{cnn_mnist_forward.1} parent=1 // pred_region
      %70 = dma.done [#allocation5], 16
    $region45: #{cnn_mnist_forward.1} parent=1 // pred_fallthru
      _
    // Predicated region
    $region46: #{cnn_mnist_forward.1} parent=1 // pred_check
      _
    $region47: #{cnn_mnist_forward.1} parent=1 // pred_check_branch
      %72 = sbr.rel (0) target = $region49
    $region48: #{cnn_mnist_forward.1} parent=1 // pred_region
      %74 = dma.done [#allocation5], 16
    $region49: #{cnn_mnist_forward.1} parent=1 // pred_fallthru
      _
    %v75 = vld [vmem:[%s0] sm:$0xff]
    %v76 = vld [vmem:[%s0 + $0x8] sm:$0xff]
    %v77 = vld [vmem:[%s0 + $0x10] sm:$0xff]
    %v78 = vld [vmem:[%s0 + $0x18] sm:$0xff]
    %v79 = vld [vmem:[%s0 + $0x20] sm:$0xff]
    %v80 = vld [vmem:[%s0 + $0x28] sm:$0xff]
    %v81 = vld [vmem:[%s1] sm:$0xff]
    %v82 = vld [vmem:[%s1 + $0x8] sm:$0xff]
    %v83 = vld [vmem:[%s1 + $0x10] sm:$0xff]
    %v84 = vld [vmem:[%s1 + $0x18] sm:$0xff]
    %v85 = vld [vmem:[%s1 + $0x20] sm:$0xff]
    %v86 = vld [vmem:[%s1 + $0x28] sm:$0xff]
    %v87 = vld [vmem:[%s1 + $0x30] sm:$0xff]
    %v88 = vld [vmem:[%s1 + $0x38] sm:$0xff]
    %v89 = vld [vmem:[%s1 + $0x40] sm:$0xff]
    %v90 = vld [vmem:[%s1 + $0x48] sm:$0xff]
    %v91 = vld [vmem:[%s1 + $0x50] sm:$0xff]
    %v92 = vld [vmem:[%s1 + $0x58] sm:$0xff]
    %v93 = vld [vmem:[%s1 + $0x60] sm:$0xff]
    %v94 = vld [vmem:[%s1 + $0x68] sm:$0xff]
    %v95 = vld [vmem:[%s1 + $0x70] sm:$0xff]
    %v96 = vld [vmem:[%s1 + $0x78] sm:$0xff]
    %v97 = vld [vmem:[%s1 + $0x80] sm:$0xff]
    %v98 = vld [vmem:[%s1 + $0x88] sm:$0xff]
    %v99 = vld [vmem:[%s1 + $0x90] sm:$0xff]
    %v100 = vld [vmem:[%s1 + $0x98] sm:$0xff]
    %v101 = vld [vmem:[%s1 + $0xa0] sm:$0xff]
    %v102 = vld [vmem:[%s1 + $0xa8] sm:$0xff]
    %v103 = vld [vmem:[%s1 + $0xb0] sm:$0xff]
    %v104 = vld [vmem:[%s1 + $0xb8] sm:$0xff]
    %v105 = vld [vmem:[%s1 + $0xc0] sm:$0xff]
    %v106 = vld [vmem:[%s1 + $0xc8] sm:$0xff]
    %v107 = vld [vmem:[%s1 + $0xd0] sm:$0xff]
    %v108 = vld [vmem:[%s1 + $0xd8] sm:$0xff]
    %v109 = vld [vmem:[%s1 + $0xe0] sm:$0xff]
    %v110 = vld [vmem:[%s1 + $0xe8] sm:$0xff]
    %v111 = vld [vmem:[%s1 + $0xf0] sm:$0xff]
    %v112 = vld [vmem:[%s1 + $0xf8] sm:$0xff]
    %v113 = vld [vmem:[%s1 + $0x100] sm:$0xff]
    %v114 = vld [vmem:[%s1 + $0x108] sm:$0xff]
    %v115 = vld [vmem:[%s1 + $0x110] sm:$0xff]
    %v116 = vld [vmem:[%s1 + $0x118] sm:$0xff]
    %v117 = vld [vmem:[%s1 + $0x120] sm:$0xff]
    %v118 = vld [vmem:[%s1 + $0x128] sm:$0xff]
    %v119 = vld [vmem:[%s1 + $0x130] sm:$0xff]
    %v120 = vld [vmem:[%s1 + $0x138] sm:$0xff]
    %v121 = vld [vmem:[%s1 + $0x140] sm:$0xff]
    %v122 = vld [vmem:[%s1 + $0x148] sm:$0xff]
    %v123 = vld [vmem:[%s1 + $0x150] sm:$0xff]
    %v124 = vld [vmem:[%s1 + $0x158] sm:$0xff]
    %v125 = vld [vmem:[%s1 + $0x160] sm:$0xff]
    %v126 = vld [vmem:[%s1 + $0x168] sm:$0xff]
    %v127 = vld [vmem:[%s1 + $0x170] sm:$0xff]
    %v128 = vld [vmem:[%s1 + $0x178] sm:$0xff]
    %v129 = vld [vmem:[%s1 + $0x180] sm:$0xff]
    %v130 = vld [vmem:[%s1 + $0x188] sm:$0xff]
    %v131 = vld [vmem:[%s1 + $0x190] sm:$0xff]
    %v132 = vld [vmem:[%s1 + $0x198] sm:$0xff]
    %v133 = vld [vmem:[%s1 + $0x1a0] sm:$0xff]
    %v134 = vld [vmem:[%s1 + $0x1a8] sm:$0xff]
    %v135 = vld [vmem:[%s1 + $0x1b0] sm:$0xff]
    %v136 = vld [vmem:[%s1 + $0x1b8] sm:$0xff]
    %v137 = vld [vmem:[%s1 + $0x1c0] sm:$0xff]
    %v138 = vld [vmem:[%s1 + $0x1c8] sm:$0xff]
    %v139 = vld [vmem:[%s1 + $0x1d0] sm:$0xff]
    %v140 = vld [vmem:[%s1 + $0x1d8] sm:$0xff]
    %v141 = vld [vmem:[%s1 + $0x1e0] sm:$0xff]
    %v142 = vld [vmem:[%s1 + $0x1e8] sm:$0xff]
    %v143 = vld [vmem:[%s1 + $0x1f0] sm:$0xff]
    %v144 = vld [vmem:[%s1 + $0x1f8] sm:$0xff]
    %v145 = vld [vmem:[%s1 + $0x200] sm:$0xff]
    %v146 = vld [vmem:[%s1 + $0x208] sm:$0xff]
    %v147 = vld [vmem:[%s1 + $0x210] sm:$0xff]
    %v148 = vld [vmem:[%s1 + $0x218] sm:$0xff]
    %v149 = vld [vmem:[%s1 + $0x220] sm:$0xff]
    %v150 = vld [vmem:[%s1 + $0x228] sm:$0xff]
    %v151 = vld [vmem:[%s1 + $0x230] sm:$0xff]
    %v152 = vld [vmem:[%s1 + $0x238] sm:$0xff]
    %v153 = vld [vmem:[%s1 + $0x240] sm:$0xff]
    %v154 = vld [vmem:[%s1 + $0x248] sm:$0xff]
    %v155 = vld [vmem:[%s1 + $0x250] sm:$0xff]
    %v156 = vld [vmem:[%s1 + $0x258] sm:$0xff]
    %v157 = vld [vmem:[%s1 + $0x260] sm:$0xff]
    %v158 = vld [vmem:[%s1 + $0x268] sm:$0xff]
    %v159 = vld [vmem:[%s1 + $0x270] sm:$0xff]
    %v160 = vld [vmem:[%s1 + $0x278] sm:$0xff]
    %v161 = vld [vmem:[%s1 + $0x280] sm:$0xff]
    %v162 = vld [vmem:[%s1 + $0x288] sm:$0xff]
    %v163 = vld [vmem:[%s1 + $0x290] sm:$0xff]
    %v164 = vld [vmem:[%s1 + $0x298] sm:$0xff]
    %v165 = vld [vmem:[%s1 + $0x2a0] sm:$0xff]
    %v166 = vld [vmem:[%s1 + $0x2a8] sm:$0xff]
    %v167 = vld [vmem:[%s1 + $0x2b0] sm:$0xff]
    %v168 = vld [vmem:[%s1 + $0x2b8] sm:$0xff]
    %v169 = vld [vmem:[%s1 + $0x2c0] sm:$0xff]
    %v170 = vld [vmem:[%s1 + $0x2c8] sm:$0xff]
    %v171 = vld [vmem:[%s1 + $0x2d0] sm:$0xff]
    %v172 = vld [vmem:[%s1 + $0x2d8] sm:$0xff]
    %v173 = vld [vmem:[%s1 + $0x2e0] sm:$0xff]
    %v174 = vld [vmem:[%s1 + $0x2e8] sm:$0xff]
    %v175 = vld [vmem:[%s1 + $0x2f0] sm:$0xff]
    %v176 = vld [vmem:[%s1 + $0x2f8] sm:$0xff]
    %v177 = vld [vmem:[%s1 + $0x300] sm:$0xff]
    %v178 = vld [vmem:[%s1 + $0x308] sm:$0xff]
    %v179 = vld [vmem:[%s1 + $0x310] sm:$0xff]
    %v180 = vld [vmem:[%s1 + $0x318] sm:$0xff]
    %v181 = vld [vmem:[%s1 + $0x320] sm:$0xff]
    %v182 = vld [vmem:[%s1 + $0x328] sm:$0xff]
    %v183 = vld [vmem:[%s1 + $0x330] sm:$0xff]
    %v184 = vld [vmem:[%s1 + $0x338] sm:$0xff]
    %v185 = vld [vmem:[%s1 + $0x340] sm:$0xff]
    %v186 = vld [vmem:[%s1 + $0x348] sm:$0xff]
    %v187 = vld [vmem:[%s1 + $0x350] sm:$0xff]
    %v188 = vld [vmem:[%s1 + $0x358] sm:$0xff]
    %v189 = vld [vmem:[%s1 + $0x360] sm:$0xff]
    %v190 = vld [vmem:[%s1 + $0x368] sm:$0xff]
    %v191 = vld [vmem:[%s1 + $0x370] sm:$0xff]
    %v192 = vld [vmem:[%s1 + $0x378] sm:$0xff]
    %v193 = vld [vmem:[%s1 + $0x380] sm:$0xff]
    %v194 = vld [vmem:[%s1 + $0x388] sm:$0xff]
    %v195 = vld [vmem:[%s1 + $0x390] sm:$0xff]
    %v196 = vld [vmem:[%s1 + $0x398] sm:$0xff]
    %v197 = vld [vmem:[%s1 + $0x3a0] sm:$0xff]
    %v198 = vld [vmem:[%s1 + $0x3a8] sm:$0xff]
    %v199 = vld [vmem:[%s1 + $0x3b0] sm:$0xff]
    %v200 = vld [vmem:[%s1 + $0x3b8] sm:$0xff]
    %v201 = vld [vmem:[%s1 + $0x3c0] sm:$0xff]
    %v202 = vld [vmem:[%s1 + $0x3c8] sm:$0xff]
    %v203 = vld [vmem:[%s1 + $0x3d0] sm:$0xff]
    %v204 = vld [vmem:[%s1 + $0x3d8] sm:$0xff]
    %v205 = vld [vmem:[%s1 + $0x3e0] sm:$0xff]
    %v206 = vld [vmem:[%s1 + $0x3e8] sm:$0xff]
    %v207 = vld [vmem:[%s1 + $0x3f0] sm:$0xff]
    %v208 = vld [vmem:[%s1 + $0x3f8] sm:$0xff]
    %v215 = vunpack.c.l.b16 %v75
    %v216 = vunpack.c.h.b16 %v75
    %v217 = vunpack.c.l.b16 %v76
    %v218 = vunpack.c.h.b16 %v76
    %v219 = vunpack.c.l.b16 %v77
    %v220 = vunpack.c.h.b16 %v77
    %v221 = vunpack.c.l.b16 %v78
    %v222 = vunpack.c.h.b16 %v78
    %v223 = vunpack.c.l.b16 %v79
    %v224 = vunpack.c.h.b16 %v79
    %v225 = vunpack.c.l.b16 %v80
    %v226 = vunpack.c.h.b16 %v80
    %v227 = vpack.c.b16 %v217, %v215
    %v228 = vpack.c.b16 %v218, %v216
    %v229 = vpack.c.b16 %v221, %v219
    %v230 = vpack.c.b16 %v222, %v220
    %v231 = vpack.c.b16 %v225, %v223
    %v232 = vpack.c.b16 %v226, %v224
    %v367 = vunpack.c.l.b16 %v81
    %v368 = vunpack.c.h.b16 %v81
    %v369 = vunpack.c.l.b16 %v82
    %v370 = vunpack.c.h.b16 %v82
    %v371 = vunpack.c.l.b16 %v83
    %v372 = vunpack.c.h.b16 %v83
    %v373 = vunpack.c.l.b16 %v84
    %v374 = vunpack.c.h.b16 %v84
    %v375 = vunpack.c.l.b16 %v85
    %v376 = vunpack.c.h.b16 %v85
    %v377 = vunpack.c.l.b16 %v86
    %v378 = vunpack.c.h.b16 %v86
    %v379 = vunpack.c.l.b16 %v87
    %v380 = vunpack.c.h.b16 %v87
    %v381 = vunpack.c.l.b16 %v88
    %v382 = vunpack.c.h.b16 %v88
    %v383 = vunpack.c.l.b16 %v89
    %v384 = vunpack.c.h.b16 %v89
    %v385 = vunpack.c.l.b16 %v90
    %v386 = vunpack.c.h.b16 %v90
    %v387 = vunpack.c.l.b16 %v91
    %v388 = vunpack.c.h.b16 %v91
    %v389 = vunpack.c.l.b16 %v92
    %v390 = vunpack.c.h.b16 %v92
    %v391 = vunpack.c.l.b16 %v93
    %v392 = vunpack.c.h.b16 %v93
    %v393 = vunpack.c.l.b16 %v94
    %v394 = vunpack.c.h.b16 %v94
    %v395 = vunpack.c.l.b16 %v95
    %v396 = vunpack.c.h.b16 %v95
    %v397 = vunpack.c.l.b16 %v96
    %v398 = vunpack.c.h.b16 %v96
    %v399 = vunpack.c.l.b16 %v97
    %v400 = vunpack.c.h.b16 %v97
    %v401 = vunpack.c.l.b16 %v98
    %v402 = vunpack.c.h.b16 %v98
    %v403 = vunpack.c.l.b16 %v99
    %v404 = vunpack.c.h.b16 %v99
    %v405 = vunpack.c.l.b16 %v100
    %v406 = vunpack.c.h.b16 %v100
    %v407 = vunpack.c.l.b16 %v101
    %v408 = vunpack.c.h.b16 %v101
    %v409 = vunpack.c.l.b16 %v102
    %v410 = vunpack.c.h.b16 %v102
    %v411 = vunpack.c.l.b16 %v103
    %v412 = vunpack.c.h.b16 %v103
    %v413 = vunpack.c.l.b16 %v104
    %v414 = vunpack.c.h.b16 %v104
    %v415 = vunpack.c.l.b16 %v105
    %v416 = vunpack.c.h.b16 %v105
    %v417 = vunpack.c.l.b16 %v106
    %v418 = vunpack.c.h.b16 %v106
    %v419 = vunpack.c.l.b16 %v107
    %v420 = vunpack.c.h.b16 %v107
    %v421 = vunpack.c.l.b16 %v108
    %v422 = vunpack.c.h.b16 %v108
    %v423 = vunpack.c.l.b16 %v109
    %v424 = vunpack.c.h.b16 %v109
    %v425 = vunpack.c.l.b16 %v110
    %v426 = vunpack.c.h.b16 %v110
    %v427 = vunpack.c.l.b16 %v111
    %v428 = vunpack.c.h.b16 %v111
    %v429 = vunpack.c.l.b16 %v112
    %v430 = vunpack.c.h.b16 %v112
    %v431 = vunpack.c.l.b16 %v113
    %v432 = vunpack.c.h.b16 %v113
    %v433 = vunpack.c.l.b16 %v114
    %v434 = vunpack.c.h.b16 %v114
    %v435 = vunpack.c.l.b16 %v115
    %v436 = vunpack.c.h.b16 %v115
    %v437 = vunpack.c.l.b16 %v116
    %v438 = vunpack.c.h.b16 %v116
    %v439 = vunpack.c.l.b16 %v117
    %v440 = vunpack.c.h.b16 %v117
    %v441 = vunpack.c.l.b16 %v118
    %v442 = vunpack.c.h.b16 %v118
    %v443 = vunpack.c.l.b16 %v119
    %v444 = vunpack.c.h.b16 %v119
    %v445 = vunpack.c.l.b16 %v120
    %v446 = vunpack.c.h.b16 %v120
    %v447 = vunpack.c.l.b16 %v121
    %v448 = vunpack.c.h.b16 %v121
    %v449 = vunpack.c.l.b16 %v122
    %v450 = vunpack.c.h.b16 %v122
    %v451 = vunpack.c.l.b16 %v123
    %v452 = vunpack.c.h.b16 %v123
    %v453 = vunpack.c.l.b16 %v124
    %v454 = vunpack.c.h.b16 %v124
    %v455 = vunpack.c.l.b16 %v125
    %v456 = vunpack.c.h.b16 %v125
    %v457 = vunpack.c.l.b16 %v126
    %v458 = vunpack.c.h.b16 %v126
    %v459 = vunpack.c.l.b16 %v127
    %v460 = vunpack.c.h.b16 %v127
    %v461 = vunpack.c.l.b16 %v128
    %v462 = vunpack.c.h.b16 %v128
    %v463 = vunpack.c.l.b16 %v129
    %v464 = vunpack.c.h.b16 %v129
    %v465 = vunpack.c.l.b16 %v130
    %v466 = vunpack.c.h.b16 %v130
    %v467 = vunpack.c.l.b16 %v131
    %v468 = vunpack.c.h.b16 %v131
    %v469 = vunpack.c.l.b16 %v132
    %v470 = vunpack.c.h.b16 %v132
    %v471 = vunpack.c.l.b16 %v133
    %v472 = vunpack.c.h.b16 %v133
    %v473 = vunpack.c.l.b16 %v134
    %v474 = vunpack.c.h.b16 %v134
    %v475 = vunpack.c.l.b16 %v135
    %v476 = vunpack.c.h.b16 %v135
    %v477 = vunpack.c.l.b16 %v136
    %v478 = vunpack.c.h.b16 %v136
    %v479 = vunpack.c.l.b16 %v137
    %v480 = vunpack.c.h.b16 %v137
    %v481 = vunpack.c.l.b16 %v138
    %v482 = vunpack.c.h.b16 %v138
    %v483 = vunpack.c.l.b16 %v139
    %v484 = vunpack.c.h.b16 %v139
    %v485 = vunpack.c.l.b16 %v140
    %v486 = vunpack.c.h.b16 %v140
    %v487 = vunpack.c.l.b16 %v141
    %v488 = vunpack.c.h.b16 %v141
    %v489 = vunpack.c.l.b16 %v142
    %v490 = vunpack.c.h.b16 %v142
    %v491 = vunpack.c.l.b16 %v143
    %v492 = vunpack.c.h.b16 %v143
    %v493 = vunpack.c.l.b16 %v144
    %v494 = vunpack.c.h.b16 %v144
    %v495 = vunpack.c.l.b16 %v145
    %v496 = vunpack.c.h.b16 %v145
    %v497 = vunpack.c.l.b16 %v146
    %v498 = vunpack.c.h.b16 %v146
    %v499 = vunpack.c.l.b16 %v147
    %v500 = vunpack.c.h.b16 %v147
    %v501 = vunpack.c.l.b16 %v148
    %v502 = vunpack.c.h.b16 %v148
    %v503 = vunpack.c.l.b16 %v149
    %v504 = vunpack.c.h.b16 %v149
    %v505 = vunpack.c.l.b16 %v150
    %v506 = vunpack.c.h.b16 %v150
    %v507 = vunpack.c.l.b16 %v151
    %v508 = vunpack.c.h.b16 %v151
    %v509 = vunpack.c.l.b16 %v152
    %v510 = vunpack.c.h.b16 %v152
    %v511 = vunpack.c.l.b16 %v153
    %v512 = vunpack.c.h.b16 %v153
    %v513 = vunpack.c.l.b16 %v154
    %v514 = vunpack.c.h.b16 %v154
    %v515 = vunpack.c.l.b16 %v155
    %v516 = vunpack.c.h.b16 %v155
    %v517 = vunpack.c.l.b16 %v156
    %v518 = vunpack.c.h.b16 %v156
    %v519 = vunpack.c.l.b16 %v157
    %v520 = vunpack.c.h.b16 %v157
    %v521 = vunpack.c.l.b16 %v158
    %v522 = vunpack.c.h.b16 %v158
    %v523 = vunpack.c.l.b16 %v159
    %v524 = vunpack.c.h.b16 %v159
    %v525 = vunpack.c.l.b16 %v160
    %v526 = vunpack.c.h.b16 %v160
    %v527 = vunpack.c.l.b16 %v161
    %v528 = vunpack.c.h.b16 %v161
    %v529 = vunpack.c.l.b16 %v162
    %v530 = vunpack.c.h.b16 %v162
    %v531 = vunpack.c.l.b16 %v163
    %v532 = vunpack.c.h.b16 %v163
    %v533 = vunpack.c.l.b16 %v164
    %v534 = vunpack.c.h.b16 %v164
    %v535 = vunpack.c.l.b16 %v165
    %v536 = vunpack.c.h.b16 %v165
    %v537 = vunpack.c.l.b16 %v166
    %v538 = vunpack.c.h.b16 %v166
    %v539 = vunpack.c.l.b16 %v167
    %v540 = vunpack.c.h.b16 %v167
    %v541 = vunpack.c.l.b16 %v168
    %v542 = vunpack.c.h.b16 %v168
    %v543 = vunpack.c.l.b16 %v169
    %v544 = vunpack.c.h.b16 %v169
    %v545 = vunpack.c.l.b16 %v170
    %v546 = vunpack.c.h.b16 %v170
    %v547 = vunpack.c.l.b16 %v171
    %v548 = vunpack.c.h.b16 %v171
    %v549 = vunpack.c.l.b16 %v172
    %v550 = vunpack.c.h.b16 %v172
    %v551 = vunpack.c.l.b16 %v173
    %v552 = vunpack.c.h.b16 %v173
    %v553 = vunpack.c.l.b16 %v174
    %v554 = vunpack.c.h.b16 %v174
    %v555 = vunpack.c.l.b16 %v175
    %v556 = vunpack.c.h.b16 %v175
    %v557 = vunpack.c.l.b16 %v176
    %v558 = vunpack.c.h.b16 %v176
    %v559 = vunpack.c.l.b16 %v177
    %v560 = vunpack.c.h.b16 %v177
    %v561 = vunpack.c.l.b16 %v178
    %v562 = vunpack.c.h.b16 %v178
    %v563 = vunpack.c.l.b16 %v179
    %v564 = vunpack.c.h.b16 %v179
    %v565 = vunpack.c.l.b16 %v180
    %v566 = vunpack.c.h.b16 %v180
    %v567 = vunpack.c.l.b16 %v181
    %v568 = vunpack.c.h.b16 %v181
    %v569 = vunpack.c.l.b16 %v182
    %v570 = vunpack.c.h.b16 %v182
    %v571 = vunpack.c.l.b16 %v183
    %v572 = vunpack.c.h.b16 %v183
    %v573 = vunpack.c.l.b16 %v184
    %v574 = vunpack.c.h.b16 %v184
    %v575 = vunpack.c.l.b16 %v185
    %v576 = vunpack.c.h.b16 %v185
    %v577 = vunpack.c.l.b16 %v186
    %v578 = vunpack.c.h.b16 %v186
    %v579 = vunpack.c.l.b16 %v187
    %v580 = vunpack.c.h.b16 %v187
    %v581 = vunpack.c.l.b16 %v188
    %v582 = vunpack.c.h.b16 %v188
    %v583 = vunpack.c.l.b16 %v189
    %v584 = vunpack.c.h.b16 %v189
    %v585 = vunpack.c.l.b16 %v190
    %v586 = vunpack.c.h.b16 %v190
    %v587 = vunpack.c.l.b16 %v191
    %v588 = vunpack.c.h.b16 %v191
    %v589 = vunpack.c.l.b16 %v192
    %v590 = vunpack.c.h.b16 %v192
    %v591 = vunpack.c.l.b16 %v193
    %v592 = vunpack.c.h.b16 %v193
    %v593 = vunpack.c.l.b16 %v194
    %v594 = vunpack.c.h.b16 %v194
    %v595 = vunpack.c.l.b16 %v195
    %v596 = vunpack.c.h.b16 %v195
    %v597 = vunpack.c.l.b16 %v196
    %v598 = vunpack.c.h.b16 %v196
    %v599 = vunpack.c.l.b16 %v197
    %v600 = vunpack.c.h.b16 %v197
    %v601 = vunpack.c.l.b16 %v198
    %v602 = vunpack.c.h.b16 %v198
    %v603 = vunpack.c.l.b16 %v199
    %v604 = vunpack.c.h.b16 %v199
    %v605 = vunpack.c.l.b16 %v200
    %v606 = vunpack.c.h.b16 %v200
    %v607 = vunpack.c.l.b16 %v201
    %v608 = vunpack.c.h.b16 %v201
    %v609 = vunpack.c.l.b16 %v202
    %v610 = vunpack.c.h.b16 %v202
    %v611 = vunpack.c.l.b16 %v203
    %v612 = vunpack.c.h.b16 %v203
    %v613 = vunpack.c.l.b16 %v204
    %v614 = vunpack.c.h.b16 %v204
    %v615 = vunpack.c.l.b16 %v205
    %v616 = vunpack.c.h.b16 %v205
    %v617 = vunpack.c.l.b16 %v206
    %v618 = vunpack.c.h.b16 %v206
    %v619 = vunpack.c.l.b16 %v207
    %v620 = vunpack.c.h.b16 %v207
    %v621 = vunpack.c.l.b16 %v208
    %v622 = vunpack.c.h.b16 %v208
    %v623 = vpack.c.b16 %v375, %v367
    %v624 = vpack.c.b16 %v376, %v368
    %v625 = vpack.c.b16 %v377, %v369
    %v626 = vpack.c.b16 %v378, %v370
    %v627 = vpack.c.b16 %v379, %v371
    %v628 = vpack.c.b16 %v380, %v372
    %v629 = vpack.c.b16 %v381, %v373
    %v630 = vpack.c.b16 %v382, %v374
    %v631 = vpack.c.b16 %v391, %v383
    %v632 = vpack.c.b16 %v392, %v384
    %v633 = vpack.c.b16 %v393, %v385
    %v634 = vpack.c.b16 %v394, %v386
    %v635 = vpack.c.b16 %v395, %v387
    %v636 = vpack.c.b16 %v396, %v388
    %v637 = vpack.c.b16 %v397, %v389
    %v638 = vpack.c.b16 %v398, %v390
    %v639 = vpack.c.b16 %v407, %v399
    %v640 = vpack.c.b16 %v408, %v400
    %v641 = vpack.c.b16 %v409, %v401
    %v642 = vpack.c.b16 %v410, %v402
    %v643 = vpack.c.b16 %v411, %v403
    %v644 = vpack.c.b16 %v412, %v404
    %v645 = vpack.c.b16 %v413, %v405
    %v646 = vpack.c.b16 %v414, %v406
    %v647 = vpack.c.b16 %v423, %v415
    %v648 = vpack.c.b16 %v424, %v416
    %v649 = vpack.c.b16 %v425, %v417
    %v650 = vpack.c.b16 %v426, %v418
    %v651 = vpack.c.b16 %v427, %v419
    %v652 = vpack.c.b16 %v428, %v420
    %v653 = vpack.c.b16 %v429, %v421
    %v654 = vpack.c.b16 %v430, %v422
    %v655 = vpack.c.b16 %v439, %v431
    %v656 = vpack.c.b16 %v440, %v432
    %v657 = vpack.c.b16 %v441, %v433
    %v658 = vpack.c.b16 %v442, %v434
    %v659 = vpack.c.b16 %v443, %v435
    %v660 = vpack.c.b16 %v444, %v436
    %v661 = vpack.c.b16 %v445, %v437
    %v662 = vpack.c.b16 %v446, %v438
    %v663 = vpack.c.b16 %v455, %v447
    %v664 = vpack.c.b16 %v456, %v448
    %v665 = vpack.c.b16 %v457, %v449
    %v666 = vpack.c.b16 %v458, %v450
    %v667 = vpack.c.b16 %v459, %v451
    %v668 = vpack.c.b16 %v460, %v452
    %v669 = vpack.c.b16 %v461, %v453
    %v670 = vpack.c.b16 %v462, %v454
    %v671 = vpack.c.b16 %v471, %v463
    %v672 = vpack.c.b16 %v472, %v464
    %v673 = vpack.c.b16 %v473, %v465
    %v674 = vpack.c.b16 %v474, %v466
    %v675 = vpack.c.b16 %v475, %v467
    %v676 = vpack.c.b16 %v476, %v468
    %v677 = vpack.c.b16 %v477, %v469
    %v678 = vpack.c.b16 %v478, %v470
    %v679 = vpack.c.b16 %v487, %v479
    %v680 = vpack.c.b16 %v488, %v480
    %v681 = vpack.c.b16 %v489, %v481
    %v682 = vpack.c.b16 %v490, %v482
    %v683 = vpack.c.b16 %v491, %v483
    %v684 = vpack.c.b16 %v492, %v484
    %v685 = vpack.c.b16 %v493, %v485
    %v686 = vpack.c.b16 %v494, %v486
    %v687 = vpack.c.b16 %v503, %v495
    %v688 = vpack.c.b16 %v504, %v496
    %v689 = vpack.c.b16 %v505, %v497
    %v690 = vpack.c.b16 %v506, %v498
    %v691 = vpack.c.b16 %v507, %v499
    %v692 = vpack.c.b16 %v508, %v500
    %v693 = vpack.c.b16 %v509, %v501
    %v694 = vpack.c.b16 %v510, %v502
    %v695 = vpack.c.b16 %v519, %v511
    %v696 = vpack.c.b16 %v520, %v512
    %v697 = vpack.c.b16 %v521, %v513
    %v698 = vpack.c.b16 %v522, %v514
    %v699 = vpack.c.b16 %v523, %v515
    %v700 = vpack.c.b16 %v524, %v516
    %v701 = vpack.c.b16 %v525, %v517
    %v702 = vpack.c.b16 %v526, %v518
    %v703 = vpack.c.b16 %v535, %v527
    %v704 = vpack.c.b16 %v536, %v528
    %v705 = vpack.c.b16 %v537, %v529
    %v706 = vpack.c.b16 %v538, %v530
    %v707 = vpack.c.b16 %v539, %v531
    %v708 = vpack.c.b16 %v540, %v532
    %v709 = vpack.c.b16 %v541, %v533
    %v710 = vpack.c.b16 %v542, %v534
    %v711 = vpack.c.b16 %v551, %v543
    %v712 = vpack.c.b16 %v552, %v544
    %v713 = vpack.c.b16 %v553, %v545
    %v714 = vpack.c.b16 %v554, %v546
    %v715 = vpack.c.b16 %v555, %v547
    %v716 = vpack.c.b16 %v556, %v548
    %v717 = vpack.c.b16 %v557, %v549
    %v718 = vpack.c.b16 %v558, %v550
    %v719 = vpack.c.b16 %v567, %v559
    %v720 = vpack.c.b16 %v568, %v560
    %v721 = vpack.c.b16 %v569, %v561
    %v722 = vpack.c.b16 %v570, %v562
    %v723 = vpack.c.b16 %v571, %v563
    %v724 = vpack.c.b16 %v572, %v564
    %v725 = vpack.c.b16 %v573, %v565
    %v726 = vpack.c.b16 %v574, %v566
    %v727 = vpack.c.b16 %v583, %v575
    %v728 = vpack.c.b16 %v584, %v576
    %v729 = vpack.c.b16 %v585, %v577
    %v730 = vpack.c.b16 %v586, %v578
    %v731 = vpack.c.b16 %v587, %v579
    %v732 = vpack.c.b16 %v588, %v580
    %v733 = vpack.c.b16 %v589, %v581
    %v734 = vpack.c.b16 %v590, %v582
    %v735 = vpack.c.b16 %v599, %v591
    %v736 = vpack.c.b16 %v600, %v592
    %v737 = vpack.c.b16 %v601, %v593
    %v738 = vpack.c.b16 %v602, %v594
    %v739 = vpack.c.b16 %v603, %v595
    %v740 = vpack.c.b16 %v604, %v596
    %v741 = vpack.c.b16 %v605, %v597
    %v742 = vpack.c.b16 %v606, %v598
    %v743 = vpack.c.b16 %v615, %v607
    %v744 = vpack.c.b16 %v616, %v608
    %v745 = vpack.c.b16 %v617, %v609
    %v746 = vpack.c.b16 %v618, %v610
    %v747 = vpack.c.b16 %v619, %v611
    %v748 = vpack.c.b16 %v620, %v612
    %v749 = vpack.c.b16 %v621, %v613
    %v750 = vpack.c.b16 %v622, %v614
    %879 = vmatpush.bf16.msra.mxu0 %v679
    %880 = vmatpush.bf16.msra.mxu0 %v671
    %881 = vmatpush.bf16.msra.mxu0 %v663
    %882 = vmatpush.bf16.msra.mxu0 %v655
    %883 = vmatpush.bf16.msra.mxu0 %v647
    %884 = vmatpush.bf16.msra.mxu0 %v639
    %885 = vmatpush.bf16.msra.mxu0 %v631
    %886 = vmatpush.bf16.msra.mxu0 %v623
    %887 = vmatmul.bf16.gmra.mxu0 %v227
    %v888 = vpop.f32.mrf.mxu0
    %v889 = vadd.f32 0.0, %v888
    %v890 = vpop.f32.mrf.mxu0
    %v891 = vadd.f32 0.0, %v890
    %892 = vmatmul.bf16.gmra.mxu0 %v229
    %v893 = vpop.f32.mrf.mxu0
    %v894 = vadd.f32 0.0, %v893
    %v895 = vpop.f32.mrf.mxu0
    %v896 = vadd.f32 0.0, %v895
    %897 = vmatmul.bf16.gmra.mxu0 %v231
    %v898 = vpop.f32.mrf.mxu0
    %v899 = vadd.f32 0.0, %v898
    %v900 = vpop.f32.mrf.mxu0
    %v901 = vadd.f32 0.0, %v900
    %902 = vdwg.mxu0
    %903 = vmatpush.bf16.msra.mxu0 %v743
    %904 = vmatpush.bf16.msra.mxu0 %v735
    %905 = vmatpush.bf16.msra.mxu0 %v727
    %906 = vmatpush.bf16.msra.mxu0 %v719
    %907 = vmatpush.bf16.msra.mxu0 %v711
    %908 = vmatpush.bf16.msra.mxu0 %v703
    %909 = vmatpush.bf16.msra.mxu0 %v695
    %910 = vmatpush.bf16.msra.mxu0 %v687
    %911 = vmatmul.bf16.gmra.mxu0 %v228
    %v912 = vpop.f32.mrf.mxu0
    %v913 = vadd.f32 %v889, %v912
    %v914 = vpop.f32.mrf.mxu0
    %v915 = vadd.f32 %v891, %v914
    %916 = vmatmul.bf16.gmra.mxu0 %v230
    %v917 = vpop.f32.mrf.mxu0
    %v918 = vadd.f32 %v894, %v917
    %v919 = vpop.f32.mrf.mxu0
    %v920 = vadd.f32 %v896, %v919
    %921 = vmatmul.bf16.gmra.mxu0 %v232
    %v922 = vpop.f32.mrf.mxu0
    %v923 = vadd.f32 %v899, %v922
    %v924 = vpop.f32.mrf.mxu0
    %v925 = vadd.f32 %v901, %v924
    %926 = vdwg.mxu0
    %927 = vmatpush.bf16.msra.mxu0 %v680
    %928 = vmatpush.bf16.msra.mxu0 %v672
    %929 = vmatpush.bf16.msra.mxu0 %v664
    %930 = vmatpush.bf16.msra.mxu0 %v656
    %931 = vmatpush.bf16.msra.mxu0 %v648
    %932 = vmatpush.bf16.msra.mxu0 %v640
    %933 = vmatpush.bf16.msra.mxu0 %v632
    %934 = vmatpush.bf16.msra.mxu0 %v624
    %935 = vmatmul.bf16.gmra.mxu0 %v227
    %v936 = vpop.f32.mrf.mxu0
    %v937 = vadd.f32 0.0, %v936
    %v938 = vpop.f32.mrf.mxu0
    %v939 = vadd.f32 0.0, %v938
    %940 = vmatmul.bf16.gmra.mxu0 %v229
    %v941 = vpop.f32.mrf.mxu0
    %v942 = vadd.f32 0.0, %v941
    %v943 = vpop.f32.mrf.mxu0
    %v944 = vadd.f32 0.0, %v943
    %945 = vmatmul.bf16.gmra.mxu0 %v231
    %v946 = vpop.f32.mrf.mxu0
    %v947 = vadd.f32 0.0, %v946
    %v948 = vpop.f32.mrf.mxu0
    %v949 = vadd.f32 0.0, %v948
    %950 = vdwg.mxu0
    %951 = vmatpush.bf16.msra.mxu0 %v744
    %952 = vmatpush.bf16.msra.mxu0 %v736
    %953 = vmatpush.bf16.msra.mxu0 %v728
    %954 = vmatpush.bf16.msra.mxu0 %v720
    %955 = vmatpush.bf16.msra.mxu0 %v712
    %956 = vmatpush.bf16.msra.mxu0 %v704
    %957 = vmatpush.bf16.msra.mxu0 %v696
    %958 = vmatpush.bf16.msra.mxu0 %v688
    %959 = vmatmul.bf16.gmra.mxu0 %v228
    %v960 = vpop.f32.mrf.mxu0
    %v961 = vadd.f32 %v937, %v960
    %v962 = vpop.f32.mrf.mxu0
    %v963 = vadd.f32 %v939, %v962
    %964 = vmatmul.bf16.gmra.mxu0 %v230
    %v965 = vpop.f32.mrf.mxu0
    %v966 = vadd.f32 %v942, %v965
    %v967 = vpop.f32.mrf.mxu0
    %v968 = vadd.f32 %v944, %v967
    %969 = vmatmul.bf16.gmra.mxu0 %v232
    %v970 = vpop.f32.mrf.mxu0
    %v971 = vadd.f32 %v947, %v970
    %v972 = vpop.f32.mrf.mxu0
    %v973 = vadd.f32 %v949, %v972
    %974 = vdwg.mxu0
    %975 = vmatpush.bf16.msra.mxu0 %v681
    %976 = vmatpush.bf16.msra.mxu0 %v673
    %977 = vmatpush.bf16.msra.mxu0 %v665
    %978 = vmatpush.bf16.msra.mxu0 %v657
    %979 = vmatpush.bf16.msra.mxu0 %v649
    %980 = vmatpush.bf16.msra.mxu0 %v641
    %981 = vmatpush.bf16.msra.mxu0 %v633
    %982 = vmatpush.bf16.msra.mxu0 %v625
    %983 = vmatmul.bf16.gmra.mxu0 %v227
    %v984 = vpop.f32.mrf.mxu0
    %v985 = vadd.f32 0.0, %v984
    %v986 = vpop.f32.mrf.mxu0
    %v987 = vadd.f32 0.0, %v986
    %988 = vmatmul.bf16.gmra.mxu0 %v229
    %v989 = vpop.f32.mrf.mxu0
    %v990 = vadd.f32 0.0, %v989
    %v991 = vpop.f32.mrf.mxu0
    %v992 = vadd.f32 0.0, %v991
    %993 = vmatmul.bf16.gmra.mxu0 %v231
    %v994 = vpop.f32.mrf.mxu0
    %v995 = vadd.f32 0.0, %v994
    %v996 = vpop.f32.mrf.mxu0
    %v997 = vadd.f32 0.0, %v996
    %998 = vdwg.mxu0
    %999 = vmatpush.bf16.msra.mxu0 %v745
    %1000 = vmatpush.bf16.msra.mxu0 %v737
    %1001 = vmatpush.bf16.msra.mxu0 %v729
    %1002 = vmatpush.bf16.msra.mxu0 %v721
    %1003 = vmatpush.bf16.msra.mxu0 %v713
    %1004 = vmatpush.bf16.msra.mxu0 %v705
    %1005 = vmatpush.bf16.msra.mxu0 %v697
    %1006 = vmatpush.bf16.msra.mxu0 %v689
    %1007 = vmatmul.bf16.gmra.mxu0 %v228
    %v1008 = vpop.f32.mrf.mxu0
    %v1009 = vadd.f32 %v985, %v1008
    %v1010 = vpop.f32.mrf.mxu0
    %v1011 = vadd.f32 %v987, %v1010
    %1012 = vmatmul.bf16.gmra.mxu0 %v230
    %v1013 = vpop.f32.mrf.mxu0
    %v1014 = vadd.f32 %v990, %v1013
    %v1015 = vpop.f32.mrf.mxu0
    %v1016 = vadd.f32 %v992, %v1015
    %1017 = vmatmul.bf16.gmra.mxu0 %v232
    %v1018 = vpop.f32.mrf.mxu0
    %v1019 = vadd.f32 %v995, %v1018
    %v1020 = vpop.f32.mrf.mxu0
    %v1021 = vadd.f32 %v997, %v1020
    %1022 = vdwg.mxu0
    %1023 = vmatpush.bf16.msra.mxu0 %v682
    %1024 = vmatpush.bf16.msra.mxu0 %v674
    %1025 = vmatpush.bf16.msra.mxu0 %v666
    %1026 = vmatpush.bf16.msra.mxu0 %v658
    %1027 = vmatpush.bf16.msra.mxu0 %v650
    %1028 = vmatpush.bf16.msra.mxu0 %v642
    %1029 = vmatpush.bf16.msra.mxu0 %v634
    %1030 = vmatpush.bf16.msra.mxu0 %v626
    %1031 = vmatmul.bf16.gmra.mxu0 %v227
    %v1032 = vpop.f32.mrf.mxu0
    %v1033 = vadd.f32 0.0, %v1032
    %v1034 = vpop.f32.mrf.mxu0
    %v1035 = vadd.f32 0.0, %v1034
    %1036 = vmatmul.bf16.gmra.mxu0 %v229
    %v1037 = vpop.f32.mrf.mxu0
    %v1038 = vadd.f32 0.0, %v1037
    %v1039 = vpop.f32.mrf.mxu0
    %v1040 = vadd.f32 0.0, %v1039
    %1041 = vmatmul.bf16.gmra.mxu0 %v231
    %v1042 = vpop.f32.mrf.mxu0
    %v1043 = vadd.f32 0.0, %v1042
    %v1044 = vpop.f32.mrf.mxu0
    %v1045 = vadd.f32 0.0, %v1044
    %1046 = vdwg.mxu0
    %1047 = vmatpush.bf16.msra.mxu0 %v746
    %1048 = vmatpush.bf16.msra.mxu0 %v738
    %1049 = vmatpush.bf16.msra.mxu0 %v730
    %1050 = vmatpush.bf16.msra.mxu0 %v722
    %1051 = vmatpush.bf16.msra.mxu0 %v714
    %1052 = vmatpush.bf16.msra.mxu0 %v706
    %1053 = vmatpush.bf16.msra.mxu0 %v698
    %1054 = vmatpush.bf16.msra.mxu0 %v690
    %1055 = vmatmul.bf16.gmra.mxu0 %v228
    %v1056 = vpop.f32.mrf.mxu0
    %v1057 = vadd.f32 %v1033, %v1056
    %v1058 = vpop.f32.mrf.mxu0
    %v1059 = vadd.f32 %v1035, %v1058
    %1060 = vmatmul.bf16.gmra.mxu0 %v230
    %v1061 = vpop.f32.mrf.mxu0
    %v1062 = vadd.f32 %v1038, %v1061
    %v1063 = vpop.f32.mrf.mxu0
    %v1064 = vadd.f32 %v1040, %v1063
    %1065 = vmatmul.bf16.gmra.mxu0 %v232
    %v1066 = vpop.f32.mrf.mxu0
    %v1067 = vadd.f32 %v1043, %v1066
    %v1068 = vpop.f32.mrf.mxu0
    %v1069 = vadd.f32 %v1045, %v1068
    %1070 = vdwg.mxu0
    %1071 = vmatpush.bf16.msra.mxu0 %v683
    %1072 = vmatpush.bf16.msra.mxu0 %v675
    %1073 = vmatpush.bf16.msra.mxu0 %v667
    %1074 = vmatpush.bf16.msra.mxu0 %v659
    %1075 = vmatpush.bf16.msra.mxu0 %v651
    %1076 = vmatpush.bf16.msra.mxu0 %v643
    %1077 = vmatpush.bf16.msra.mxu0 %v635
    %1078 = vmatpush.bf16.msra.mxu0 %v627
    %1079 = vmatmul.bf16.gmra.mxu0 %v227
    %v1080 = vpop.f32.mrf.mxu0
    %v1081 = vadd.f32 0.0, %v1080
    %v1082 = vpop.f32.mrf.mxu0
    %v1083 = vadd.f32 0.0, %v1082
    %1084 = vmatmul.bf16.gmra.mxu0 %v229
    %v1085 = vpop.f32.mrf.mxu0
    %v1086 = vadd.f32 0.0, %v1085
    %v1087 = vpop.f32.mrf.mxu0
    %v1088 = vadd.f32 0.0, %v1087
    %1089 = vmatmul.bf16.gmra.mxu0 %v231
    %v1090 = vpop.f32.mrf.mxu0
    %v1091 = vadd.f32 0.0, %v1090
    %v1092 = vpop.f32.mrf.mxu0
    %v1093 = vadd.f32 0.0, %v1092
    %1094 = vdwg.mxu0
    %1095 = vmatpush.bf16.msra.mxu0 %v747
    %1096 = vmatpush.bf16.msra.mxu0 %v739
    %1097 = vmatpush.bf16.msra.mxu0 %v731
    %1098 = vmatpush.bf16.msra.mxu0 %v723
    %1099 = vmatpush.bf16.msra.mxu0 %v715
    %1100 = vmatpush.bf16.msra.mxu0 %v707
    %1101 = vmatpush.bf16.msra.mxu0 %v699
    %1102 = vmatpush.bf16.msra.mxu0 %v691
    %1103 = vmatmul.bf16.gmra.mxu0 %v228
    %v1104 = vpop.f32.mrf.mxu0
    %v1105 = vadd.f32 %v1081, %v1104
    %v1106 = vpop.f32.mrf.mxu0
    %v1107 = vadd.f32 %v1083, %v1106
    %1108 = vmatmul.bf16.gmra.mxu0 %v230
    %v1109 = vpop.f32.mrf.mxu0
    %v1110 = vadd.f32 %v1086, %v1109
    %v1111 = vpop.f32.mrf.mxu0
    %v1112 = vadd.f32 %v1088, %v1111
    %1113 = vmatmul.bf16.gmra.mxu0 %v232
    %v1114 = vpop.f32.mrf.mxu0
    %v1115 = vadd.f32 %v1091, %v1114
    %v1116 = vpop.f32.mrf.mxu0
    %v1117 = vadd.f32 %v1093, %v1116
    %1118 = vdwg.mxu0
    %1119 = vmatpush.bf16.msra.mxu0 %v684
    %1120 = vmatpush.bf16.msra.mxu0 %v676
    %1121 = vmatpush.bf16.msra.mxu0 %v668
    %1122 = vmatpush.bf16.msra.mxu0 %v660
    %1123 = vmatpush.bf16.msra.mxu0 %v652
    %1124 = vmatpush.bf16.msra.mxu0 %v644
    %1125 = vmatpush.bf16.msra.mxu0 %v636
    %1126 = vmatpush.bf16.msra.mxu0 %v628
    %1127 = vmatmul.bf16.gmra.mxu0 %v227
    %v1128 = vpop.f32.mrf.mxu0
    %v1129 = vadd.f32 0.0, %v1128
    %v1130 = vpop.f32.mrf.mxu0
    %v1131 = vadd.f32 0.0, %v1130
    %1132 = vmatmul.bf16.gmra.mxu0 %v229
    %v1133 = vpop.f32.mrf.mxu0
    %v1134 = vadd.f32 0.0, %v1133
    %v1135 = vpop.f32.mrf.mxu0
    %v1136 = vadd.f32 0.0, %v1135
    %1137 = vmatmul.bf16.gmra.mxu0 %v231
    %v1138 = vpop.f32.mrf.mxu0
    %v1139 = vadd.f32 0.0, %v1138
    %v1140 = vpop.f32.mrf.mxu0
    %v1141 = vadd.f32 0.0, %v1140
    %1142 = vdwg.mxu0
    %1143 = vmatpush.bf16.msra.mxu0 %v748
    %1144 = vmatpush.bf16.msra.mxu0 %v740
    %1145 = vmatpush.bf16.msra.mxu0 %v732
    %1146 = vmatpush.bf16.msra.mxu0 %v724
    %1147 = vmatpush.bf16.msra.mxu0 %v716
    %1148 = vmatpush.bf16.msra.mxu0 %v708
    %1149 = vmatpush.bf16.msra.mxu0 %v700
    %1150 = vmatpush.bf16.msra.mxu0 %v692
    %1151 = vmatmul.bf16.gmra.mxu0 %v228
    %v1152 = vpop.f32.mrf.mxu0
    %v1153 = vadd.f32 %v1129, %v1152
    %v1154 = vpop.f32.mrf.mxu0
    %v1155 = vadd.f32 %v1131, %v1154
    %1156 = vmatmul.bf16.gmra.mxu0 %v230
    %v1157 = vpop.f32.mrf.mxu0
    %v1158 = vadd.f32 %v1134, %v1157
    %v1159 = vpop.f32.mrf.mxu0
    %v1160 = vadd.f32 %v1136, %v1159
    %1161 = vmatmul.bf16.gmra.mxu0 %v232
    %v1162 = vpop.f32.mrf.mxu0
    %v1163 = vadd.f32 %v1139, %v1162
    %v1164 = vpop.f32.mrf.mxu0
    %v1165 = vadd.f32 %v1141, %v1164
    %1166 = vdwg.mxu0
    %1167 = vmatpush.bf16.msra.mxu0 %v685
    %1168 = vmatpush.bf16.msra.mxu0 %v677
    %1169 = vmatpush.bf16.msra.mxu0 %v669
    %1170 = vmatpush.bf16.msra.mxu0 %v661
    %1171 = vmatpush.bf16.msra.mxu0 %v653
    %1172 = vmatpush.bf16.msra.mxu0 %v645
    %1173 = vmatpush.bf16.msra.mxu0 %v637
    %1174 = vmatpush.bf16.msra.mxu0 %v629
    %1175 = vmatmul.bf16.gmra.mxu0 %v227
    %v1176 = vpop.f32.mrf.mxu0
    %v1177 = vadd.f32 0.0, %v1176
    %v1178 = vpop.f32.mrf.mxu0
    %v1179 = vadd.f32 0.0, %v1178
    %1180 = vmatmul.bf16.gmra.mxu0 %v229
    %v1181 = vpop.f32.mrf.mxu0
    %v1182 = vadd.f32 0.0, %v1181
    %v1183 = vpop.f32.mrf.mxu0
    %v1184 = vadd.f32 0.0, %v1183
    %1185 = vmatmul.bf16.gmra.mxu0 %v231
    %v1186 = vpop.f32.mrf.mxu0
    %v1187 = vadd.f32 0.0, %v1186
    %v1188 = vpop.f32.mrf.mxu0
    %v1189 = vadd.f32 0.0, %v1188
    %1190 = vdwg.mxu0
    %1191 = vmatpush.bf16.msra.mxu0 %v749
    %1192 = vmatpush.bf16.msra.mxu0 %v741
    %1193 = vmatpush.bf16.msra.mxu0 %v733
    %1194 = vmatpush.bf16.msra.mxu0 %v725
    %1195 = vmatpush.bf16.msra.mxu0 %v717
    %1196 = vmatpush.bf16.msra.mxu0 %v709
    %1197 = vmatpush.bf16.msra.mxu0 %v701
    %1198 = vmatpush.bf16.msra.mxu0 %v693
    %1199 = vmatmul.bf16.gmra.mxu0 %v228
    %v1200 = vpop.f32.mrf.mxu0
    %v1201 = vadd.f32 %v1177, %v1200
    %v1202 = vpop.f32.mrf.mxu0
    %v1203 = vadd.f32 %v1179, %v1202
    %1204 = vmatmul.bf16.gmra.mxu0 %v230
    %v1205 = vpop.f32.mrf.mxu0
    %v1206 = vadd.f32 %v1182, %v1205
    %v1207 = vpop.f32.mrf.mxu0
    %v1208 = vadd.f32 %v1184, %v1207
    %1209 = vmatmul.bf16.gmra.mxu0 %v232
    %v1210 = vpop.f32.mrf.mxu0
    %v1211 = vadd.f32 %v1187, %v1210
    %v1212 = vpop.f32.mrf.mxu0
    %v1213 = vadd.f32 %v1189, %v1212
    %1214 = vdwg.mxu0
    %1215 = vmatpush.bf16.msra.mxu0 %v686
    %1216 = vmatpush.bf16.msra.mxu0 %v678
    %1217 = vmatpush.bf16.msra.mxu0 %v670
    %1218 = vmatpush.bf16.msra.mxu0 %v662
    %1219 = vmatpush.bf16.msra.mxu0 %v654
    %1220 = vmatpush.bf16.msra.mxu0 %v646
    %1221 = vmatpush.bf16.msra.mxu0 %v638
    %1222 = vmatpush.bf16.msra.mxu0 %v630
    %1223 = vmatmul.bf16.gmra.mxu0 %v227
    %v1224 = vpop.f32.mrf.mxu0
    %v1225 = vadd.f32 0.0, %v1224
    %v1226 = vpop.f32.mrf.mxu0
    %v1227 = vadd.f32 0.0, %v1226
    %1228 = vmatmul.bf16.gmra.mxu0 %v229
    %v1229 = vpop.f32.mrf.mxu0
    %v1230 = vadd.f32 0.0, %v1229
    %v1231 = vpop.f32.mrf.mxu0
    %v1232 = vadd.f32 0.0, %v1231
    %1233 = vmatmul.bf16.gmra.mxu0 %v231
    %v1234 = vpop.f32.mrf.mxu0
    %v1235 = vadd.f32 0.0, %v1234
    %v1236 = vpop.f32.mrf.mxu0
    %v1237 = vadd.f32 0.0, %v1236
    %1238 = vdwg.mxu0
    %1239 = vmatpush.bf16.msra.mxu0 %v750
    %1240 = vmatpush.bf16.msra.mxu0 %v742
    %1241 = vmatpush.bf16.msra.mxu0 %v734
    %1242 = vmatpush.bf16.msra.mxu0 %v726
    %1243 = vmatpush.bf16.msra.mxu0 %v718
    %1244 = vmatpush.bf16.msra.mxu0 %v710
    %1245 = vmatpush.bf16.msra.mxu0 %v702
    %1246 = vmatpush.bf16.msra.mxu0 %v694
    %1247 = vmatmul.bf16.gmra.mxu0 %v228
    %v1248 = vpop.f32.mrf.mxu0
    %v1249 = vadd.f32 %v1225, %v1248
    %v1250 = vpop.f32.mrf.mxu0
    %v1251 = vadd.f32 %v1227, %v1250
    %1252 = vmatmul.bf16.gmra.mxu0 %v230
    %v1253 = vpop.f32.mrf.mxu0
    %v1254 = vadd.f32 %v1230, %v1253
    %v1255 = vpop.f32.mrf.mxu0
    %v1256 = vadd.f32 %v1232, %v1255
    %1257 = vmatmul.bf16.gmra.mxu0 %v232
    %v1258 = vpop.f32.mrf.mxu0
    %v1259 = vadd.f32 %v1235, %v1258
    %v1260 = vpop.f32.mrf.mxu0
    %v1261 = vadd.f32 %v1237, %v1260
    %1262 = vdwg.mxu0
    %v1263 = vld [vmem:[%s2] sm:$0x1]
    %v1264 = vmax.f32 %v913, %v961
    %v1265 = vmax.f32 %v915, %v963
    %v1266 = vmax.f32 %v918, %v966
    %v1267 = vmax.f32 %v920, %v968
    %v1268 = vmax.f32 %v923, %v971
    %v1269 = vmax.f32 %v925, %v973
    %v1270 = vmax.f32 %v1009, %v1057
    %v1271 = vmax.f32 %v1011, %v1059
    %v1272 = vmax.f32 %v1014, %v1062
    %v1273 = vmax.f32 %v1016, %v1064
    %v1274 = vmax.f32 %v1019, %v1067
    %v1275 = vmax.f32 %v1021, %v1069
    %v1276 = vmax.f32 %v1264, %v1270
    %v1277 = vmax.f32 %v1265, %v1271
    %v1278 = vmax.f32 %v1266, %v1272
    %v1279 = vmax.f32 %v1267, %v1273
    %v1280 = vmax.f32 %v1268, %v1274
    %v1281 = vmax.f32 %v1269, %v1275
    %v1283 = vperm.slane %v1263, 0
    %v1285 = vadd.f32 %v1276, %v1283
    %v1286 = vadd.f32 %v1277, %v1283
    %v1287 = vadd.f32 %v1278, %v1283
    %v1288 = vadd.f32 %v1279, %v1283
    %v1289 = vadd.f32 %v1280, %v1283
    %v1290 = vadd.f32 %v1281, %v1283
    %v1291 = vmax.f32 %v1285, 0.0
    %v1292 = vmax.f32 %v1286, 0.0
    %v1293 = vmax.f32 %v1287, 0.0
    %v1294 = vmax.f32 %v1288, 0.0
    %v1295 = vmax.f32 %v1289, 0.0
    %v1296 = vmax.f32 %v1290, 0.0
    %v1297 = vpack.c.bf16 %v1291, %v1291
    %v1298 = vpack.c.bf16 %v1292, %v1292
    %v1299 = vpack.c.bf16 %v1293, %v1293
    %v1300 = vpack.c.bf16 %v1294, %v1294
    %v1301 = vpack.c.bf16 %v1295, %v1295
    %v1302 = vpack.c.bf16 %v1296, %v1296
    %v1303 = vmax.f32 %v1105, %v1153
    %v1304 = vmax.f32 %v1107, %v1155
    %v1305 = vmax.f32 %v1110, %v1158
    %v1306 = vmax.f32 %v1112, %v1160
    %v1307 = vmax.f32 %v1115, %v1163
    %v1308 = vmax.f32 %v1117, %v1165
    %v1309 = vmax.f32 %v1201, %v1249
    %v1310 = vmax.f32 %v1203, %v1251
    %v1311 = vmax.f32 %v1206, %v1254
    %v1312 = vmax.f32 %v1208, %v1256
    %v1313 = vmax.f32 %v1211, %v1259
    %v1314 = vmax.f32 %v1213, %v1261
    %v1315 = vmax.f32 %v1303, %v1309
    %v1316 = vmax.f32 %v1304, %v1310
    %v1317 = vmax.f32 %v1305, %v1311
    %v1318 = vmax.f32 %v1306, %v1312
    %v1319 = vmax.f32 %v1307, %v1313
    %v1320 = vmax.f32 %v1308, %v1314
    %v1321 = vadd.f32 %v1315, %v1283
    %v1322 = vadd.f32 %v1316, %v1283
    %v1323 = vadd.f32 %v1317, %v1283
    %v1324 = vadd.f32 %v1318, %v1283
    %v1325 = vadd.f32 %v1319, %v1283
    %v1326 = vadd.f32 %v1320, %v1283
    %v1327 = vmax.f32 %v1321, 0.0
    %v1328 = vmax.f32 %v1322, 0.0
    %v1329 = vmax.f32 %v1323, 0.0
    %v1330 = vmax.f32 %v1324, 0.0
    %v1331 = vmax.f32 %v1325, 0.0
    %v1332 = vmax.f32 %v1326, 0.0
    %v1333 = vpack.c.bf16 %v1327, %v1327
    %v1334 = vpack.c.bf16 %v1328, %v1328
    %v1335 = vpack.c.bf16 %v1329, %v1329
    %v1336 = vpack.c.bf16 %v1330, %v1330
    %v1337 = vpack.c.bf16 %v1331, %v1331
    %v1338 = vpack.c.bf16 %v1332, %v1332
    %v1343 = vunpack.c.l.b16 %v1297
    %v1344 = vunpack.c.l.b16 %v1298
    %v1345 = vunpack.c.l.b16 %v1299
    %v1346 = vunpack.c.l.b16 %v1300
    %v1347 = vpack.c.b16 %v1344, %v1343
    %v1348 = vpack.c.b16 %v1346, %v1345
    %v1355 = vunpack.c.l.b16 %v1333
    %v1356 = vunpack.c.l.b16 %v1334
    %v1357 = vunpack.c.l.b16 %v1335
    %v1358 = vunpack.c.l.b16 %v1336
    %v1359 = vpack.c.b16 %v1356, %v1355
    %v1360 = vpack.c.b16 %v1358, %v1357
    %v1364 = vunpack.c.l.b16 %v1301
    %v1365 = vpack.c.b16 %v1345, %v1344
    %v1366 = vpack.c.b16 %v1364, %v1346
    %v1370 = vunpack.c.l.b16 %v1337
    %v1371 = vpack.c.b16 %v1357, %v1356
    %v1372 = vpack.c.b16 %v1370, %v1358
    %v1376 = vunpack.c.l.b16 %v1302
    %v1377 = vpack.c.b16 %v1376, %v1364
    %v1380 = vunpack.c.l.b16 %v1338
    %v1381 = vpack.c.b16 %v1380, %v1370
    %v1383 = vld [vmem:[#allocation2] sm:$0xff]
    %v1384 = vld [vmem:[#allocation2 + $0x8] sm:$0xff]
    %v1385 = vld [vmem:[#allocation2 + $0x10] sm:$0xff]
    %v1386 = vld [vmem:[#allocation2 + $0x18] sm:$0xff]
    %v1387 = vld [vmem:[#allocation2 + $0x20] sm:$0xff]
    %v1388 = vld [vmem:[#allocation2 + $0x28] sm:$0xff]
    %v1389 = vld [vmem:[#allocation2 + $0x30] sm:$0xff]
    %v1390 = vld [vmem:[#allocation2 + $0x38] sm:$0xff]
    %v1391 = vld [vmem:[#allocation2 + $0x40] sm:$0xff]
    %v1392 = vld [vmem:[#allocation2 + $0x48] sm:$0xff]
    %v1393 = vld [vmem:[#allocation2 + $0x50] sm:$0xff]
    %v1394 = vld [vmem:[#allocation2 + $0x58] sm:$0xff]
    %v1395 = vld [vmem:[#allocation2 + $0x60] sm:$0xff]
    %v1396 = vld [vmem:[#allocation2 + $0x68] sm:$0xff]
    %v1397 = vld [vmem:[#allocation2 + $0x70] sm:$0xff]
    %v1398 = vld [vmem:[#allocation2 + $0x78] sm:$0xff]
    %v1399 = vld [vmem:[#allocation2 + $0x80] sm:$0xff]
    %v1400 = vld [vmem:[#allocation2 + $0x88] sm:$0xff]
    %v1401 = vld [vmem:[#allocation2 + $0x90] sm:$0xff]
    %v1402 = vld [vmem:[#allocation2 + $0x98] sm:$0xff]
    %v1403 = vld [vmem:[#allocation2 + $0xa0] sm:$0xff]
    %v1404 = vld [vmem:[#allocation2 + $0xa8] sm:$0xff]
    %v1405 = vld [vmem:[#allocation2 + $0xb0] sm:$0xff]
    %v1406 = vld [vmem:[#allocation2 + $0xb8] sm:$0xff]
    %v1407 = vld [vmem:[#allocation2 + $0xc0] sm:$0xff]
    %v1408 = vld [vmem:[#allocation2 + $0xc8] sm:$0xff]
    %v1409 = vld [vmem:[#allocation2 + $0xd0] sm:$0xff]
    %v1410 = vld [vmem:[#allocation2 + $0xd8] sm:$0xff]
    %v1411 = vld [vmem:[#allocation2 + $0xe0] sm:$0xff]
    %v1412 = vld [vmem:[#allocation2 + $0xe8] sm:$0xff]
    %v1413 = vld [vmem:[#allocation2 + $0xf0] sm:$0xff]
    %v1414 = vld [vmem:[#allocation2 + $0xf8] sm:$0xff]
    %v1415 = vld [vmem:[#allocation2 + $0x100] sm:$0xff]
    %v1416 = vld [vmem:[#allocation2 + $0x108] sm:$0xff]
    %v1417 = vld [vmem:[#allocation2 + $0x110] sm:$0xff]
    %v1418 = vld [vmem:[#allocation2 + $0x118] sm:$0xff]
    %v1419 = vld [vmem:[#allocation2 + $0x120] sm:$0xff]
    %v1420 = vld [vmem:[#allocation2 + $0x128] sm:$0xff]
    %v1421 = vld [vmem:[#allocation2 + $0x130] sm:$0xff]
    %v1422 = vld [vmem:[#allocation2 + $0x138] sm:$0xff]
    %v1423 = vld [vmem:[#allocation2 + $0x140] sm:$0xff]
    %v1424 = vld [vmem:[#allocation2 + $0x148] sm:$0xff]
    %v1425 = vld [vmem:[#allocation2 + $0x150] sm:$0xff]
    %v1426 = vld [vmem:[#allocation2 + $0x158] sm:$0xff]
    %v1427 = vld [vmem:[#allocation2 + $0x160] sm:$0xff]
    %v1428 = vld [vmem:[#allocation2 + $0x168] sm:$0xff]
    %v1429 = vld [vmem:[#allocation2 + $0x170] sm:$0xff]
    %v1430 = vld [vmem:[#allocation2 + $0x178] sm:$0xff]
    %v1431 = vld [vmem:[#allocation2 + $0x180] sm:$0xff]
    %v1432 = vld [vmem:[#allocation2 + $0x188] sm:$0xff]
    %v1433 = vld [vmem:[#allocation2 + $0x190] sm:$0xff]
    %v1434 = vld [vmem:[#allocation2 + $0x198] sm:$0xff]
    %v1435 = vld [vmem:[#allocation2 + $0x1a0] sm:$0xff]
    %v1436 = vld [vmem:[#allocation2 + $0x1a8] sm:$0xff]
    %v1437 = vld [vmem:[#allocation2 + $0x1b0] sm:$0xff]
    %v1438 = vld [vmem:[#allocation2 + $0x1b8] sm:$0xff]
    %v1439 = vld [vmem:[#allocation2 + $0x1c0] sm:$0xff]
    %v1440 = vld [vmem:[#allocation2 + $0x1c8] sm:$0xff]
    %v1441 = vld [vmem:[#allocation2 + $0x1d0] sm:$0xff]
    %v1442 = vld [vmem:[#allocation2 + $0x1d8] sm:$0xff]
    %v1443 = vld [vmem:[#allocation2 + $0x1e0] sm:$0xff]
    %v1444 = vld [vmem:[#allocation2 + $0x1e8] sm:$0xff]
    %v1445 = vld [vmem:[#allocation2 + $0x1f0] sm:$0xff]
    %v1446 = vld [vmem:[#allocation2 + $0x1f8] sm:$0xff]
    %v1447 = vld [vmem:[#allocation2 + $0x200] sm:$0xff]
    %v1448 = vld [vmem:[#allocation2 + $0x208] sm:$0xff]
    %v1449 = vld [vmem:[#allocation2 + $0x210] sm:$0xff]
    %v1450 = vld [vmem:[#allocation2 + $0x218] sm:$0xff]
    %v1451 = vld [vmem:[#allocation2 + $0x220] sm:$0xff]
    %v1452 = vld [vmem:[#allocation2 + $0x228] sm:$0xff]
    %v1453 = vld [vmem:[#allocation2 + $0x230] sm:$0xff]
    %v1454 = vld [vmem:[#allocation2 + $0x238] sm:$0xff]
    %v1455 = vld [vmem:[#allocation2 + $0x240] sm:$0xff]
    %v1456 = vld [vmem:[#allocation2 + $0x248] sm:$0xff]
    %v1457 = vld [vmem:[#allocation2 + $0x250] sm:$0xff]
    %v1458 = vld [vmem:[#allocation2 + $0x258] sm:$0xff]
    %v1459 = vld [vmem:[#allocation2 + $0x260] sm:$0xff]
    %v1460 = vld [vmem:[#allocation2 + $0x268] sm:$0xff]
    %v1461 = vld [vmem:[#allocation2 + $0x270] sm:$0xff]
    %v1462 = vld [vmem:[#allocation2 + $0x278] sm:$0xff]
    %v1543 = vunpack.c.l.b16 %v1383
    %v1544 = vunpack.c.h.b16 %v1383
    %v1545 = vunpack.c.l.b16 %v1384
    %v1546 = vunpack.c.h.b16 %v1384
    %v1547 = vunpack.c.l.b16 %v1385
    %v1548 = vunpack.c.h.b16 %v1385
    %v1549 = vunpack.c.l.b16 %v1386
    %v1550 = vunpack.c.h.b16 %v1386
    %v1551 = vunpack.c.l.b16 %v1387
    %v1552 = vunpack.c.h.b16 %v1387
    %v1553 = vunpack.c.l.b16 %v1388
    %v1554 = vunpack.c.h.b16 %v1388
    %v1555 = vunpack.c.l.b16 %v1389
    %v1556 = vunpack.c.h.b16 %v1389
    %v1557 = vunpack.c.l.b16 %v1390
    %v1558 = vunpack.c.h.b16 %v1390
    %v1559 = vunpack.c.l.b16 %v1391
    %v1560 = vunpack.c.h.b16 %v1391
    %v1561 = vunpack.c.l.b16 %v1392
    %v1562 = vunpack.c.h.b16 %v1392
    %v1563 = vunpack.c.l.b16 %v1393
    %v1564 = vunpack.c.h.b16 %v1393
    %v1565 = vunpack.c.l.b16 %v1394
    %v1566 = vunpack.c.h.b16 %v1394
    %v1567 = vunpack.c.l.b16 %v1395
    %v1568 = vunpack.c.h.b16 %v1395
    %v1569 = vunpack.c.l.b16 %v1396
    %v1570 = vunpack.c.h.b16 %v1396
    %v1571 = vunpack.c.l.b16 %v1397
    %v1572 = vunpack.c.h.b16 %v1397
    %v1573 = vunpack.c.l.b16 %v1398
    %v1574 = vunpack.c.h.b16 %v1398
    %v1575 = vunpack.c.l.b16 %v1399
    %v1576 = vunpack.c.h.b16 %v1399
    %v1577 = vunpack.c.l.b16 %v1400
    %v1578 = vunpack.c.h.b16 %v1400
    %v1579 = vunpack.c.l.b16 %v1401
    %v1580 = vunpack.c.h.b16 %v1401
    %v1581 = vunpack.c.l.b16 %v1402
    %v1582 = vunpack.c.h.b16 %v1402
    %v1583 = vunpack.c.l.b16 %v1403
    %v1584 = vunpack.c.h.b16 %v1403
    %v1585 = vunpack.c.l.b16 %v1404
    %v1586 = vunpack.c.h.b16 %v1404
    %v1587 = vunpack.c.l.b16 %v1405
    %v1588 = vunpack.c.h.b16 %v1405
    %v1589 = vunpack.c.l.b16 %v1406
    %v1590 = vunpack.c.h.b16 %v1406
    %v1591 = vunpack.c.l.b16 %v1407
    %v1592 = vunpack.c.h.b16 %v1407
    %v1593 = vunpack.c.l.b16 %v1408
    %v1594 = vunpack.c.h.b16 %v1408
    %v1595 = vunpack.c.l.b16 %v1409
    %v1596 = vunpack.c.h.b16 %v1409
    %v1597 = vunpack.c.l.b16 %v1410
    %v1598 = vunpack.c.h.b16 %v1410
    %v1599 = vunpack.c.l.b16 %v1411
    %v1600 = vunpack.c.h.b16 %v1411
    %v1601 = vunpack.c.l.b16 %v1412
    %v1602 = vunpack.c.h.b16 %v1412
    %v1603 = vunpack.c.l.b16 %v1413
    %v1604 = vunpack.c.h.b16 %v1413
    %v1605 = vunpack.c.l.b16 %v1414
    %v1606 = vunpack.c.h.b16 %v1414
    %v1607 = vunpack.c.l.b16 %v1415
    %v1608 = vunpack.c.h.b16 %v1415
    %v1609 = vunpack.c.l.b16 %v1416
    %v1610 = vunpack.c.h.b16 %v1416
    %v1611 = vunpack.c.l.b16 %v1417
    %v1612 = vunpack.c.h.b16 %v1417
    %v1613 = vunpack.c.l.b16 %v1418
    %v1614 = vunpack.c.h.b16 %v1418
    %v1615 = vunpack.c.l.b16 %v1419
    %v1616 = vunpack.c.h.b16 %v1419
    %v1617 = vunpack.c.l.b16 %v1420
    %v1618 = vunpack.c.h.b16 %v1420
    %v1619 = vunpack.c.l.b16 %v1421
    %v1620 = vunpack.c.h.b16 %v1421
    %v1621 = vunpack.c.l.b16 %v1422
    %v1622 = vunpack.c.h.b16 %v1422
    %v1623 = vunpack.c.l.b16 %v1423
    %v1624 = vunpack.c.h.b16 %v1423
    %v1625 = vunpack.c.l.b16 %v1424
    %v1626 = vunpack.c.h.b16 %v1424
    %v1627 = vunpack.c.l.b16 %v1425
    %v1628 = vunpack.c.h.b16 %v1425
    %v1629 = vunpack.c.l.b16 %v1426
    %v1630 = vunpack.c.h.b16 %v1426
    %v1631 = vunpack.c.l.b16 %v1427
    %v1632 = vunpack.c.h.b16 %v1427
    %v1633 = vunpack.c.l.b16 %v1428
    %v1634 = vunpack.c.h.b16 %v1428
    %v1635 = vunpack.c.l.b16 %v1429
    %v1636 = vunpack.c.h.b16 %v1429
    %v1637 = vunpack.c.l.b16 %v1430
    %v1638 = vunpack.c.h.b16 %v1430
    %v1639 = vunpack.c.l.b16 %v1431
    %v1640 = vunpack.c.h.b16 %v1431
    %v1641 = vunpack.c.l.b16 %v1432
    %v1642 = vunpack.c.h.b16 %v1432
    %v1643 = vunpack.c.l.b16 %v1433
    %v1644 = vunpack.c.h.b16 %v1433
    %v1645 = vunpack.c.l.b16 %v1434
    %v1646 = vunpack.c.h.b16 %v1434
    %v1647 = vunpack.c.l.b16 %v1435
    %v1648 = vunpack.c.h.b16 %v1435
    %v1649 = vunpack.c.l.b16 %v1436
    %v1650 = vunpack.c.h.b16 %v1436
    %v1651 = vunpack.c.l.b16 %v1437
    %v1652 = vunpack.c.h.b16 %v1437
    %v1653 = vunpack.c.l.b16 %v1438
    %v1654 = vunpack.c.h.b16 %v1438
    %v1655 = vunpack.c.l.b16 %v1439
    %v1656 = vunpack.c.h.b16 %v1439
    %v1657 = vunpack.c.l.b16 %v1440
    %v1658 = vunpack.c.h.b16 %v1440
    %v1659 = vunpack.c.l.b16 %v1441
    %v1660 = vunpack.c.h.b16 %v1441
    %v1661 = vunpack.c.l.b16 %v1442
    %v1662 = vunpack.c.h.b16 %v1442
    %v1663 = vunpack.c.l.b16 %v1443
    %v1664 = vunpack.c.h.b16 %v1443
    %v1665 = vunpack.c.l.b16 %v1444
    %v1666 = vunpack.c.h.b16 %v1444
    %v1667 = vunpack.c.l.b16 %v1445
    %v1668 = vunpack.c.h.b16 %v1445
    %v1669 = vunpack.c.l.b16 %v1446
    %v1670 = vunpack.c.h.b16 %v1446
    %v1671 = vunpack.c.l.b16 %v1447
    %v1672 = vunpack.c.h.b16 %v1447
    %v1673 = vunpack.c.l.b16 %v1448
    %v1674 = vunpack.c.h.b16 %v1448
    %v1675 = vunpack.c.l.b16 %v1449
    %v1676 = vunpack.c.h.b16 %v1449
    %v1677 = vunpack.c.l.b16 %v1450
    %v1678 = vunpack.c.h.b16 %v1450
    %v1679 = vunpack.c.l.b16 %v1451
    %v1680 = vunpack.c.h.b16 %v1451
    %v1681 = vunpack.c.l.b16 %v1452
    %v1682 = vunpack.c.h.b16 %v1452
    %v1683 = vunpack.c.l.b16 %v1453
    %v1684 = vunpack.c.h.b16 %v1453
    %v1685 = vunpack.c.l.b16 %v1454
    %v1686 = vunpack.c.h.b16 %v1454
    %v1687 = vunpack.c.l.b16 %v1455
    %v1688 = vunpack.c.h.b16 %v1455
    %v1689 = vunpack.c.l.b16 %v1456
    %v1690 = vunpack.c.h.b16 %v1456
    %v1691 = vunpack.c.l.b16 %v1457
    %v1692 = vunpack.c.h.b16 %v1457
    %v1693 = vunpack.c.l.b16 %v1458
    %v1694 = vunpack.c.h.b16 %v1458
    %v1695 = vunpack.c.l.b16 %v1459
    %v1696 = vunpack.c.h.b16 %v1459
    %v1697 = vunpack.c.l.b16 %v1460
    %v1698 = vunpack.c.h.b16 %v1460
    %v1699 = vunpack.c.l.b16 %v1461
    %v1700 = vunpack.c.h.b16 %v1461
    %v1701 = vunpack.c.l.b16 %v1462
    %v1702 = vunpack.c.h.b16 %v1462
    %v1703 = vpack.c.b16 %v1545, %v1543
    %v1704 = vpack.c.b16 %v1546, %v1544
    %v1705 = vpack.c.b16 %v1549, %v1547
    %v1706 = vpack.c.b16 %v1550, %v1548
    %v1707 = vpack.c.b16 %v1553, %v1551
    %v1708 = vpack.c.b16 %v1554, %v1552
    %v1709 = vpack.c.b16 %v1557, %v1555
    %v1710 = vpack.c.b16 %v1558, %v1556
    %v1711 = vpack.c.b16 %v1561, %v1559
    %v1712 = vpack.c.b16 %v1562, %v1560
    %v1713 = vpack.c.b16 %v1565, %v1563
    %v1714 = vpack.c.b16 %v1566, %v1564
    %v1715 = vpack.c.b16 %v1569, %v1567
    %v1716 = vpack.c.b16 %v1570, %v1568
    %v1717 = vpack.c.b16 %v1573, %v1571
    %v1718 = vpack.c.b16 %v1574, %v1572
    %v1719 = vpack.c.b16 %v1577, %v1575
    %v1720 = vpack.c.b16 %v1578, %v1576
    %v1721 = vpack.c.b16 %v1581, %v1579
    %v1722 = vpack.c.b16 %v1582, %v1580
    %v1723 = vpack.c.b16 %v1585, %v1583
    %v1724 = vpack.c.b16 %v1586, %v1584
    %v1725 = vpack.c.b16 %v1589, %v1587
    %v1726 = vpack.c.b16 %v1590, %v1588
    %v1727 = vpack.c.b16 %v1593, %v1591
    %v1728 = vpack.c.b16 %v1594, %v1592
    %v1729 = vpack.c.b16 %v1597, %v1595
    %v1730 = vpack.c.b16 %v1598, %v1596
    %v1731 = vpack.c.b16 %v1601, %v1599
    %v1732 = vpack.c.b16 %v1602, %v1600
    %v1733 = vpack.c.b16 %v1605, %v1603
    %v1734 = vpack.c.b16 %v1606, %v1604
    %v1735 = vpack.c.b16 %v1609, %v1607
    %v1736 = vpack.c.b16 %v1610, %v1608
    %v1737 = vpack.c.b16 %v1613, %v1611
    %v1738 = vpack.c.b16 %v1614, %v1612
    %v1739 = vpack.c.b16 %v1617, %v1615
    %v1740 = vpack.c.b16 %v1618, %v1616
    %v1741 = vpack.c.b16 %v1621, %v1619
    %v1742 = vpack.c.b16 %v1622, %v1620
    %v1743 = vpack.c.b16 %v1625, %v1623
    %v1744 = vpack.c.b16 %v1626, %v1624
    %v1745 = vpack.c.b16 %v1629, %v1627
    %v1746 = vpack.c.b16 %v1630, %v1628
    %v1747 = vpack.c.b16 %v1633, %v1631
    %v1748 = vpack.c.b16 %v1634, %v1632
    %v1749 = vpack.c.b16 %v1637, %v1635
    %v1750 = vpack.c.b16 %v1638, %v1636
    %v1751 = vpack.c.b16 %v1641, %v1639
    %v1752 = vpack.c.b16 %v1642, %v1640
    %v1753 = vpack.c.b16 %v1645, %v1643
    %v1754 = vpack.c.b16 %v1646, %v1644
    %v1755 = vpack.c.b16 %v1649, %v1647
    %v1756 = vpack.c.b16 %v1650, %v1648
    %v1757 = vpack.c.b16 %v1653, %v1651
    %v1758 = vpack.c.b16 %v1654, %v1652
    %v1759 = vpack.c.b16 %v1657, %v1655
    %v1760 = vpack.c.b16 %v1658, %v1656
    %v1761 = vpack.c.b16 %v1661, %v1659
    %v1762 = vpack.c.b16 %v1662, %v1660
    %v1763 = vpack.c.b16 %v1665, %v1663
    %v1764 = vpack.c.b16 %v1666, %v1664
    %v1765 = vpack.c.b16 %v1669, %v1667
    %v1766 = vpack.c.b16 %v1670, %v1668
    %v1767 = vpack.c.b16 %v1673, %v1671
    %v1768 = vpack.c.b16 %v1674, %v1672
    %v1769 = vpack.c.b16 %v1677, %v1675
    %v1770 = vpack.c.b16 %v1678, %v1676
    %v1771 = vpack.c.b16 %v1681, %v1679
    %v1772 = vpack.c.b16 %v1682, %v1680
    %v1773 = vpack.c.b16 %v1685, %v1683
    %v1774 = vpack.c.b16 %v1686, %v1684
    %v1775 = vpack.c.b16 %v1689, %v1687
    %v1776 = vpack.c.b16 %v1690, %v1688
    %v1777 = vpack.c.b16 %v1693, %v1691
    %v1778 = vpack.c.b16 %v1694, %v1692
    %v1779 = vpack.c.b16 %v1697, %v1695
    %v1780 = vpack.c.b16 %v1698, %v1696
    %v1781 = vpack.c.b16 %v1701, %v1699
    %v1782 = vpack.c.b16 %v1702, %v1700
    %1863 = vmatpush.bf16.msra.mxu0 %v1717
    %1864 = vmatpush.bf16.msra.mxu0 %v1715
    %1865 = vmatpush.bf16.msra.mxu0 %v1713
    %1866 = vmatpush.bf16.msra.mxu0 %v1711
    %1867 = vmatpush.bf16.msra.mxu0 %v1709
    %1868 = vmatpush.bf16.msra.mxu0 %v1707
    %1869 = vmatpush.bf16.msra.mxu0 %v1705
    %1870 = vmatpush.bf16.msra.mxu0 %v1703
    %1871 = vmatmul.bf16.gmra.mxu0 %v1347
    %v1872 = vpop.f32.mrf.mxu0
    %v1873 = vadd.f32 0.0, %v1872
    %v1874 = vpop.f32.mrf.mxu0
    %v1875 = vadd.f32 0.0, %v1874
    %1876 = vmatmul.bf16.gmra.mxu0 %v1348
    %v1877 = vpop.f32.mrf.mxu0
    %v1878 = vadd.f32 0.0, %v1877
    %v1879 = vpop.f32.mrf.mxu0
    %v1880 = vadd.f32 0.0, %v1879
    %1881 = vdwg.mxu0
    %1882 = vmatpush.bf16.msra.mxu0 %v1733
    %1883 = vmatpush.bf16.msra.mxu0 %v1731
    %1884 = vmatpush.bf16.msra.mxu0 %v1729
    %1885 = vmatpush.bf16.msra.mxu0 %v1727
    %1886 = vmatpush.bf16.msra.mxu0 %v1725
    %1887 = vmatpush.bf16.msra.mxu0 %v1723
    %1888 = vmatpush.bf16.msra.mxu0 %v1721
    %1889 = vmatpush.bf16.msra.mxu0 %v1719
    %1890 = vmatmul.bf16.gmra.mxu0 %v1359
    %v1891 = vpop.f32.mrf.mxu0
    %v1892 = vadd.f32 %v1873, %v1891
    %v1893 = vpop.f32.mrf.mxu0
    %v1894 = vadd.f32 %v1875, %v1893
    %1895 = vmatmul.bf16.gmra.mxu0 %v1360
    %v1896 = vpop.f32.mrf.mxu0
    %v1897 = vadd.f32 %v1878, %v1896
    %v1898 = vpop.f32.mrf.mxu0
    %v1899 = vadd.f32 %v1880, %v1898
    %1900 = vdwg.mxu0
    %1901 = vmatpush.bf16.msra.mxu0 %v1749
    %1902 = vmatpush.bf16.msra.mxu0 %v1747
    %1903 = vmatpush.bf16.msra.mxu0 %v1745
    %1904 = vmatpush.bf16.msra.mxu0 %v1743
    %1905 = vmatpush.bf16.msra.mxu0 %v1741
    %1906 = vmatpush.bf16.msra.mxu0 %v1739
    %1907 = vmatpush.bf16.msra.mxu0 %v1737
    %1908 = vmatpush.bf16.msra.mxu0 %v1735
    %1909 = vmatmul.bf16.gmra.mxu0 %v1365
    %v1910 = vpop.f32.mrf.mxu0
    %v1911 = vadd.f32 %v1892, %v1910
    %v1912 = vpop.f32.mrf.mxu0
    %v1913 = vadd.f32 %v1894, %v1912
    %1914 = vmatmul.bf16.gmra.mxu0 %v1366
    %v1915 = vpop.f32.mrf.mxu0
    %v1916 = vadd.f32 %v1897, %v1915
    %v1917 = vpop.f32.mrf.mxu0
    %v1918 = vadd.f32 %v1899, %v1917
    %1919 = vdwg.mxu0
    %1920 = vmatpush.bf16.msra.mxu0 %v1765
    %1921 = vmatpush.bf16.msra.mxu0 %v1763
    %1922 = vmatpush.bf16.msra.mxu0 %v1761
    %1923 = vmatpush.bf16.msra.mxu0 %v1759
    %1924 = vmatpush.bf16.msra.mxu0 %v1757
    %1925 = vmatpush.bf16.msra.mxu0 %v1755
    %1926 = vmatpush.bf16.msra.mxu0 %v1753
    %1927 = vmatpush.bf16.msra.mxu0 %v1751
    %1928 = vmatmul.bf16.gmra.mxu0 %v1371
    %v1929 = vpop.f32.mrf.mxu0
    %v1930 = vadd.f32 %v1911, %v1929
    %v1931 = vpop.f32.mrf.mxu0
    %v1932 = vadd.f32 %v1913, %v1931
    %1933 = vmatmul.bf16.gmra.mxu0 %v1372
    %v1934 = vpop.f32.mrf.mxu0
    %v1935 = vadd.f32 %v1916, %v1934
    %v1936 = vpop.f32.mrf.mxu0
    %v1937 = vadd.f32 %v1918, %v1936
    %1938 = vdwg.mxu0
    %1939 = vmatpush.bf16.msra.mxu0 %v1781
    %1940 = vmatpush.bf16.msra.mxu0 %v1779
    %1941 = vmatpush.bf16.msra.mxu0 %v1777
    %1942 = vmatpush.bf16.msra.mxu0 %v1775
    %1943 = vmatpush.bf16.msra.mxu0 %v1773
    %1944 = vmatpush.bf16.msra.mxu0 %v1771
    %1945 = vmatpush.bf16.msra.mxu0 %v1769
    %1946 = vmatpush.bf16.msra.mxu0 %v1767
    %1947 = vmatmul.bf16.gmra.mxu0 %v1348
    %v1948 = vpop.f32.mrf.mxu0
    %v1949 = vadd.f32 %v1930, %v1948
    %v1950 = vpop.f32.mrf.mxu0
    %v1951 = vadd.f32 %v1932, %v1950
    %1952 = vmatmul.bf16.gmra.mxu0 %v1377
    %v1953 = vpop.f32.mrf.mxu0
    %v1954 = vadd.f32 %v1935, %v1953
    %v1955 = vpop.f32.mrf.mxu0
    %v1956 = vadd.f32 %v1937, %v1955
    %1957 = vdwg.mxu0
    %1958 = vmatpush.bf16.msra.mxu0 %v1718
    %1959 = vmatpush.bf16.msra.mxu0 %v1716
    %1960 = vmatpush.bf16.msra.mxu0 %v1714
    %1961 = vmatpush.bf16.msra.mxu0 %v1712
    %1962 = vmatpush.bf16.msra.mxu0 %v1710
    %1963 = vmatpush.bf16.msra.mxu0 %v1708
    %1964 = vmatpush.bf16.msra.mxu0 %v1706
    %1965 = vmatpush.bf16.msra.mxu0 %v1704
    %1966 = vmatmul.bf16.gmra.mxu0 %v1347
    %v1967 = vpop.f32.mrf.mxu0
    %v1968 = vadd.f32 0.0, %v1967
    %v1969 = vpop.f32.mrf.mxu0
    %v1970 = vadd.f32 0.0, %v1969
    %1971 = vmatmul.bf16.gmra.mxu0 %v1348
    %v1972 = vpop.f32.mrf.mxu0
    %v1973 = vadd.f32 0.0, %v1972
    %v1974 = vpop.f32.mrf.mxu0
    %v1975 = vadd.f32 0.0, %v1974
    %1976 = vdwg.mxu0
    %1977 = vmatpush.bf16.msra.mxu0 %v1734
    %1978 = vmatpush.bf16.msra.mxu0 %v1732
    %1979 = vmatpush.bf16.msra.mxu0 %v1730
    %1980 = vmatpush.bf16.msra.mxu0 %v1728
    %1981 = vmatpush.bf16.msra.mxu0 %v1726
    %1982 = vmatpush.bf16.msra.mxu0 %v1724
    %1983 = vmatpush.bf16.msra.mxu0 %v1722
    %1984 = vmatpush.bf16.msra.mxu0 %v1720
    %1985 = vmatmul.bf16.gmra.mxu0 %v1359
    %v1986 = vpop.f32.mrf.mxu0
    %v1987 = vadd.f32 %v1968, %v1986
    %v1988 = vpop.f32.mrf.mxu0
    %v1989 = vadd.f32 %v1970, %v1988
    %1990 = vmatmul.bf16.gmra.mxu0 %v1360
    %v1991 = vpop.f32.mrf.mxu0
    %v1992 = vadd.f32 %v1973, %v1991
    %v1993 = vpop.f32.mrf.mxu0
    %v1994 = vadd.f32 %v1975, %v1993
    %1995 = vdwg.mxu0
    %1996 = vmatpush.bf16.msra.mxu0 %v1750
    %1997 = vmatpush.bf16.msra.mxu0 %v1748
    %1998 = vmatpush.bf16.msra.mxu0 %v1746
    %1999 = vmatpush.bf16.msra.mxu0 %v1744
    %2000 = vmatpush.bf16.msra.mxu0 %v1742
    %2001 = vmatpush.bf16.msra.mxu0 %v1740
    %2002 = vmatpush.bf16.msra.mxu0 %v1738
    %2003 = vmatpush.bf16.msra.mxu0 %v1736
    %2004 = vmatmul.bf16.gmra.mxu0 %v1365
    %v2005 = vpop.f32.mrf.mxu0
    %v2006 = vadd.f32 %v1987, %v2005
    %v2007 = vpop.f32.mrf.mxu0
    %v2008 = vadd.f32 %v1989, %v2007
    %2009 = vmatmul.bf16.gmra.mxu0 %v1366
    %v2010 = vpop.f32.mrf.mxu0
    %v2011 = vadd.f32 %v1992, %v2010
    %v2012 = vpop.f32.mrf.mxu0
    %v2013 = vadd.f32 %v1994, %v2012
    %2014 = vdwg.mxu0
    %2015 = vmatpush.bf16.msra.mxu0 %v1766
    %2016 = vmatpush.bf16.msra.mxu0 %v1764
    %2017 = vmatpush.bf16.msra.mxu0 %v1762
    %2018 = vmatpush.bf16.msra.mxu0 %v1760
    %2019 = vmatpush.bf16.msra.mxu0 %v1758
    %2020 = vmatpush.bf16.msra.mxu0 %v1756
    %2021 = vmatpush.bf16.msra.mxu0 %v1754
    %2022 = vmatpush.bf16.msra.mxu0 %v1752
    %2023 = vmatmul.bf16.gmra.mxu0 %v1371
    %v2024 = vpop.f32.mrf.mxu0
    %v2025 = vadd.f32 %v2006, %v2024
    %v2026 = vpop.f32.mrf.mxu0
    %v2027 = vadd.f32 %v2008, %v2026
    %2028 = vmatmul.bf16.gmra.mxu0 %v1372
    %v2029 = vpop.f32.mrf.mxu0
    %v2030 = vadd.f32 %v2011, %v2029
    %v2031 = vpop.f32.mrf.mxu0
    %v2032 = vadd.f32 %v2013, %v2031
    %2033 = vdwg.mxu0
    %2034 = vmatpush.bf16.msra.mxu0 %v1782
    %2035 = vmatpush.bf16.msra.mxu0 %v1780
    %2036 = vmatpush.bf16.msra.mxu0 %v1778
    %2037 = vmatpush.bf16.msra.mxu0 %v1776
    %2038 = vmatpush.bf16.msra.mxu0 %v1774
    %2039 = vmatpush.bf16.msra.mxu0 %v1772
    %2040 = vmatpush.bf16.msra.mxu0 %v1770
    %2041 = vmatpush.bf16.msra.mxu0 %v1768
    %2042 = vmatmul.bf16.gmra.mxu0 %v1348
    %v2043 = vpop.f32.mrf.mxu0
    %v2044 = vadd.f32 %v2025, %v2043
    %v2045 = vpop.f32.mrf.mxu0
    %v2046 = vadd.f32 %v2027, %v2045
    %2047 = vmatmul.bf16.gmra.mxu0 %v1377
    %v2048 = vpop.f32.mrf.mxu0
    %v2049 = vadd.f32 %v2030, %v2048
    %v2050 = vpop.f32.mrf.mxu0
    %v2051 = vadd.f32 %v2032, %v2050
    %2052 = vdwg.mxu0
    %2053 = vmatpush.bf16.msra.mxu0 %v1717
    %2054 = vmatpush.bf16.msra.mxu0 %v1715
    %2055 = vmatpush.bf16.msra.mxu0 %v1713
    %2056 = vmatpush.bf16.msra.mxu0 %v1711
    %2057 = vmatpush.bf16.msra.mxu0 %v1709
    %2058 = vmatpush.bf16.msra.mxu0 %v1707
    %2059 = vmatpush.bf16.msra.mxu0 %v1705
    %2060 = vmatpush.bf16.msra.mxu0 %v1703
    %2061 = vmatmul.bf16.gmra.mxu0 %v1359
    %v2062 = vpop.f32.mrf.mxu0
    %v2063 = vadd.f32 0.0, %v2062
    %v2064 = vpop.f32.mrf.mxu0
    %v2065 = vadd.f32 0.0, %v2064
    %2066 = vmatmul.bf16.gmra.mxu0 %v1360
    %v2067 = vpop.f32.mrf.mxu0
    %v2068 = vadd.f32 0.0, %v2067
    %v2069 = vpop.f32.mrf.mxu0
    %v2070 = vadd.f32 0.0, %v2069
    %2071 = vdwg.mxu0
    %2072 = vmatpush.bf16.msra.mxu0 %v1733
    %2073 = vmatpush.bf16.msra.mxu0 %v1731
    %2074 = vmatpush.bf16.msra.mxu0 %v1729
    %2075 = vmatpush.bf16.msra.mxu0 %v1727
    %2076 = vmatpush.bf16.msra.mxu0 %v1725
    %2077 = vmatpush.bf16.msra.mxu0 %v1723
    %2078 = vmatpush.bf16.msra.mxu0 %v1721
    %2079 = vmatpush.bf16.msra.mxu0 %v1719
    %2080 = vmatmul.bf16.gmra.mxu0 %v1365
    %v2081 = vpop.f32.mrf.mxu0
    %v2082 = vadd.f32 %v2063, %v2081
    %v2083 = vpop.f32.mrf.mxu0
    %v2084 = vadd.f32 %v2065, %v2083
    %2085 = vmatmul.bf16.gmra.mxu0 %v1366
    %v2086 = vpop.f32.mrf.mxu0
    %v2087 = vadd.f32 %v2068, %v2086
    %v2088 = vpop.f32.mrf.mxu0
    %v2089 = vadd.f32 %v2070, %v2088
    %2090 = vdwg.mxu0
    %2091 = vmatpush.bf16.msra.mxu0 %v1749
    %2092 = vmatpush.bf16.msra.mxu0 %v1747
    %2093 = vmatpush.bf16.msra.mxu0 %v1745
    %2094 = vmatpush.bf16.msra.mxu0 %v1743
    %2095 = vmatpush.bf16.msra.mxu0 %v1741
    %2096 = vmatpush.bf16.msra.mxu0 %v1739
    %2097 = vmatpush.bf16.msra.mxu0 %v1737
    %2098 = vmatpush.bf16.msra.mxu0 %v1735
    %2099 = vmatmul.bf16.gmra.mxu0 %v1371
    %v2100 = vpop.f32.mrf.mxu0
    %v2101 = vadd.f32 %v2082, %v2100
    %v2102 = vpop.f32.mrf.mxu0
    %v2103 = vadd.f32 %v2084, %v2102
    %2104 = vmatmul.bf16.gmra.mxu0 %v1372
    %v2105 = vpop.f32.mrf.mxu0
    %v2106 = vadd.f32 %v2087, %v2105
    %v2107 = vpop.f32.mrf.mxu0
    %v2108 = vadd.f32 %v2089, %v2107
    %2109 = vdwg.mxu0
    %2110 = vmatpush.bf16.msra.mxu0 %v1765
    %2111 = vmatpush.bf16.msra.mxu0 %v1763
    %2112 = vmatpush.bf16.msra.mxu0 %v1761
    %2113 = vmatpush.bf16.msra.mxu0 %v1759
    %2114 = vmatpush.bf16.msra.mxu0 %v1757
    %2115 = vmatpush.bf16.msra.mxu0 %v1755
    %2116 = vmatpush.bf16.msra.mxu0 %v1753
    %2117 = vmatpush.bf16.msra.mxu0 %v1751
    %2118 = vmatmul.bf16.gmra.mxu0 %v1348
    %v2119 = vpop.f32.mrf.mxu0
    %v2120 = vadd.f32 %v2101, %v2119
    %v2121 = vpop.f32.mrf.mxu0
    %v2122 = vadd.f32 %v2103, %v2121
    %2123 = vmatmul.bf16.gmra.mxu0 %v1377
    %v2124 = vpop.f32.mrf.mxu0
    %v2125 = vadd.f32 %v2106, %v2124
    %v2126 = vpop.f32.mrf.mxu0
    %v2127 = vadd.f32 %v2108, %v2126
    %2128 = vdwg.mxu0
    %2129 = vmatpush.bf16.msra.mxu0 %v1781
    %2130 = vmatpush.bf16.msra.mxu0 %v1779
    %2131 = vmatpush.bf16.msra.mxu0 %v1777
    %2132 = vmatpush.bf16.msra.mxu0 %v1775
    %2133 = vmatpush.bf16.msra.mxu0 %v1773
    %2134 = vmatpush.bf16.msra.mxu0 %v1771
    %2135 = vmatpush.bf16.msra.mxu0 %v1769
    %2136 = vmatpush.bf16.msra.mxu0 %v1767
    %2137 = vmatmul.bf16.gmra.mxu0 %v1360
    %v2138 = vpop.f32.mrf.mxu0
    %v2139 = vadd.f32 %v2120, %v2138
    %v2140 = vpop.f32.mrf.mxu0
    %v2141 = vadd.f32 %v2122, %v2140
    %2142 = vmatmul.bf16.gmra.mxu0 %v1381
    %v2143 = vpop.f32.mrf.mxu0
    %v2144 = vadd.f32 %v2125, %v2143
    %v2145 = vpop.f32.mrf.mxu0
    %v2146 = vadd.f32 %v2127, %v2145
    %2147 = vdwg.mxu0
    %2148 = vmatpush.bf16.msra.mxu0 %v1718
    %2149 = vmatpush.bf16.msra.mxu0 %v1716
    %2150 = vmatpush.bf16.msra.mxu0 %v1714
    %2151 = vmatpush.bf16.msra.mxu0 %v1712
    %2152 = vmatpush.bf16.msra.mxu0 %v1710
    %2153 = vmatpush.bf16.msra.mxu0 %v1708
    %2154 = vmatpush.bf16.msra.mxu0 %v1706
    %2155 = vmatpush.bf16.msra.mxu0 %v1704
    %2156 = vmatmul.bf16.gmra.mxu0 %v1359
    %v2157 = vpop.f32.mrf.mxu0
    %v2158 = vadd.f32 0.0, %v2157
    %v2159 = vpop.f32.mrf.mxu0
    %v2160 = vadd.f32 0.0, %v2159
    %2161 = vmatmul.bf16.gmra.mxu0 %v1360
    %v2162 = vpop.f32.mrf.mxu0
    %v2163 = vadd.f32 0.0, %v2162
    %v2164 = vpop.f32.mrf.mxu0
    %v2165 = vadd.f32 0.0, %v2164
    %2166 = vdwg.mxu0
    %2167 = vmatpush.bf16.msra.mxu0 %v1734
    %2168 = vmatpush.bf16.msra.mxu0 %v1732
    %2169 = vmatpush.bf16.msra.mxu0 %v1730
    %2170 = vmatpush.bf16.msra.mxu0 %v1728
    %2171 = vmatpush.bf16.msra.mxu0 %v1726
    %2172 = vmatpush.bf16.msra.mxu0 %v1724
    %2173 = vmatpush.bf16.msra.mxu0 %v1722
    %2174 = vmatpush.bf16.msra.mxu0 %v1720
    %2175 = vmatmul.bf16.gmra.mxu0 %v1365
    %v2176 = vpop.f32.mrf.mxu0
    %v2177 = vadd.f32 %v2158, %v2176
    %v2178 = vpop.f32.mrf.mxu0
    %v2179 = vadd.f32 %v2160, %v2178
    %2180 = vmatmul.bf16.gmra.mxu0 %v1366
    %v2181 = vpop.f32.mrf.mxu0
    %v2182 = vadd.f32 %v2163, %v2181
    %v2183 = vpop.f32.mrf.mxu0
    %v2184 = vadd.f32 %v2165, %v2183
    %2185 = vdwg.mxu0
    %2186 = vmatpush.bf16.msra.mxu0 %v1750
    %2187 = vmatpush.bf16.msra.mxu0 %v1748
    %2188 = vmatpush.bf16.msra.mxu0 %v1746
    %2189 = vmatpush.bf16.msra.mxu0 %v1744
    %2190 = vmatpush.bf16.msra.mxu0 %v1742
    %2191 = vmatpush.bf16.msra.mxu0 %v1740
    %2192 = vmatpush.bf16.msra.mxu0 %v1738
    %2193 = vmatpush.bf16.msra.mxu0 %v1736
    %2194 = vmatmul.bf16.gmra.mxu0 %v1371
    %v2195 = vpop.f32.mrf.mxu0
    %v2196 = vadd.f32 %v2177, %v2195
    %v2197 = vpop.f32.mrf.mxu0
    %v2198 = vadd.f32 %v2179, %v2197
    %2199 = vmatmul.bf16.gmra.mxu0 %v1372
    %v2200 = vpop.f32.mrf.mxu0
    %v2201 = vadd.f32 %v2182, %v2200
    %v2202 = vpop.f32.mrf.mxu0
    %v2203 = vadd.f32 %v2184, %v2202
    %2204 = vdwg.mxu0
    %2205 = vmatpush.bf16.msra.mxu0 %v1766
    %2206 = vmatpush.bf16.msra.mxu0 %v1764
    %2207 = vmatpush.bf16.msra.mxu0 %v1762
    %2208 = vmatpush.bf16.msra.mxu0 %v1760
    %2209 = vmatpush.bf16.msra.mxu0 %v1758
    %2210 = vmatpush.bf16.msra.mxu0 %v1756
    %2211 = vmatpush.bf16.msra.mxu0 %v1754
    %2212 = vmatpush.bf16.msra.mxu0 %v1752
    %2213 = vmatmul.bf16.gmra.mxu0 %v1348
    %v2214 = vpop.f32.mrf.mxu0
    %v2215 = vadd.f32 %v2196, %v2214
    %v2216 = vpop.f32.mrf.mxu0
    %v2217 = vadd.f32 %v2198, %v2216
    %2218 = vmatmul.bf16.gmra.mxu0 %v1377
    %v2219 = vpop.f32.mrf.mxu0
    %v2220 = vadd.f32 %v2201, %v2219
    %v2221 = vpop.f32.mrf.mxu0
    %v2222 = vadd.f32 %v2203, %v2221
    %2223 = vdwg.mxu0
    %2224 = vmatpush.bf16.msra.mxu0 %v1782
    %2225 = vmatpush.bf16.msra.mxu0 %v1780
    %2226 = vmatpush.bf16.msra.mxu0 %v1778
    %2227 = vmatpush.bf16.msra.mxu0 %v1776
    %2228 = vmatpush.bf16.msra.mxu0 %v1774
    %2229 = vmatpush.bf16.msra.mxu0 %v1772
    %2230 = vmatpush.bf16.msra.mxu0 %v1770
    %2231 = vmatpush.bf16.msra.mxu0 %v1768
    %2232 = vmatmul.bf16.gmra.mxu0 %v1360
    %v2233 = vpop.f32.mrf.mxu0
    %v2234 = vadd.f32 %v2215, %v2233
    %v2235 = vpop.f32.mrf.mxu0
    %v2236 = vadd.f32 %v2217, %v2235
    %2237 = vmatmul.bf16.gmra.mxu0 %v1381
    %v2238 = vpop.f32.mrf.mxu0
    %v2239 = vadd.f32 %v2220, %v2238
    %v2240 = vpop.f32.mrf.mxu0
    %v2241 = vadd.f32 %v2222, %v2240
    %2242 = vdwg.mxu0
    %v2243 = vmax.f32 %v1949, %v2044
    %v2244 = vmax.f32 %v1951, %v2046
    %v2245 = vmax.f32 %v1954, %v2049
    %v2246 = vmax.f32 %v1956, %v2051
    %v2247 = vmax.f32 %v2139, %v2234
    %v2248 = vmax.f32 %v2141, %v2236
    %v2249 = vmax.f32 %v2144, %v2239
    %v2250 = vmax.f32 %v2146, %v2241
    %v2251 = vmax.f32 %v2243, %v2247
    %v2252 = vmax.f32 %v2244, %v2248
    %v2253 = vmax.f32 %v2245, %v2249
    %v2254 = vmax.f32 %v2246, %v2250
    %v2255 = vld [vmem:[%s4] sm:$0x1]
    %v2257 = vperm.slane %v2255, 0
    %v2259 = vadd.f32 %v2251, %v2257
    %v2260 = vadd.f32 %v2252, %v2257
    %v2261 = vadd.f32 %v2253, %v2257
    %v2262 = vadd.f32 %v2254, %v2257
    %v2263 = vmax.f32 %v2259, 0.0
    %v2264 = vmax.f32 %v2260, 0.0
    %v2265 = vmax.f32 %v2261, 0.0
    %v2266 = vmax.f32 %v2262, 0.0
    %v2267 = vpack.c.bf16 %v2263, %v2263
    %v2268 = vpack.c.bf16 %v2264, %v2264
    %v2269 = vpack.c.bf16 %v2265, %v2265
    %v2270 = vpack.c.bf16 %v2266, %v2266
    %v2271 = vld [vmem:[%s5] sm:$0xf]
    %v2272 = vld [vmem:[%s5 + $0x4] sm:$0xf]
    %v2273 = vld [vmem:[%s5 + $0x8] sm:$0xf]
    %v2274 = vld [vmem:[%s5 + $0xc] sm:$0xf]
    %v2275 = vld [vmem:[%s5 + $0x10] sm:$0xf]
    %v2276 = vld [vmem:[%s5 + $0x14] sm:$0xf]
    %v2277 = vld [vmem:[%s5 + $0x18] sm:$0xf]
    %v2278 = vld [vmem:[%s5 + $0x1c] sm:$0xf]
    %v2279 = vld [vmem:[%s5 + $0x20] sm:$0xf]
    %v2280 = vld [vmem:[%s5 + $0x24] sm:$0xf]
    %v2281 = vld [vmem:[%s5 + $0x28] sm:$0xf]
    %v2282 = vld [vmem:[%s5 + $0x2c] sm:$0xf]
    %v2283 = vld [vmem:[%s5 + $0x30] sm:$0xf]
    %v2284 = vld [vmem:[%s5 + $0x34] sm:$0xf]
    %v2285 = vld [vmem:[%s5 + $0x38] sm:$0xf]
    %v2286 = vld [vmem:[%s5 + $0x3c] sm:$0xf]
    %v2287 = vld [vmem:[%s5 + $0x40] sm:$0xf]
    %v2288 = vld [vmem:[%s5 + $0x44] sm:$0xf]
    %v2289 = vld [vmem:[%s5 + $0x48] sm:$0xf]
    %v2290 = vld [vmem:[%s5 + $0x4c] sm:$0xf]
    %v2291 = vld [vmem:[%s5 + $0x50] sm:$0xf]
    %v2292 = vld [vmem:[%s5 + $0x54] sm:$0xf]
    %v2293 = vld [vmem:[%s5 + $0x58] sm:$0xf]
    %v2294 = vld [vmem:[%s5 + $0x5c] sm:$0xf]
    %v2295 = vld [vmem:[%s5 + $0x60] sm:$0xf]
    %v2296 = vld [vmem:[%s5 + $0x64] sm:$0xf]
    %v2297 = vld [vmem:[%s5 + $0x68] sm:$0xf]
    %v2298 = vld [vmem:[%s5 + $0x6c] sm:$0xf]
    %v2299 = vld [vmem:[%s5 + $0x70] sm:$0xf]
    %v2300 = vld [vmem:[%s5 + $0x74] sm:$0xf]
    %v2301 = vld [vmem:[%s5 + $0x78] sm:$0xf]
    %v2302 = vld [vmem:[%s5 + $0x7c] sm:$0xf]
    %v2303 = vld [vmem:[%s5 + $0x80] sm:$0xf]
    %v2304 = vld [vmem:[%s5 + $0x84] sm:$0xf]
    %v2305 = vld [vmem:[%s5 + $0x88] sm:$0xf]
    %v2306 = vld [vmem:[%s5 + $0x8c] sm:$0xf]
    %v2307 = vld [vmem:[%s5 + $0x90] sm:$0xf]
    %v2308 = vld [vmem:[%s5 + $0x94] sm:$0xf]
    %v2309 = vld [vmem:[%s5 + $0x98] sm:$0xf]
    %v2310 = vld [vmem:[%s5 + $0x9c] sm:$0xf]
    %v2311 = vld [vmem:[%s5 + $0xa0] sm:$0xf]
    %v2312 = vld [vmem:[%s5 + $0xa4] sm:$0xf]
    %v2313 = vld [vmem:[%s5 + $0xa8] sm:$0xf]
    %v2314 = vld [vmem:[%s5 + $0xac] sm:$0xf]
    %v2315 = vld [vmem:[%s5 + $0xb0] sm:$0xf]
    %v2316 = vld [vmem:[%s5 + $0xb4] sm:$0xf]
    %v2317 = vld [vmem:[%s5 + $0xb8] sm:$0xf]
    %v2318 = vld [vmem:[%s5 + $0xbc] sm:$0xf]
    %v2319 = vld [vmem:[%s5 + $0xc0] sm:$0xf]
    %v2320 = vld [vmem:[%s5 + $0xc4] sm:$0xf]
    %v2321 = vld [vmem:[%s5 + $0xc8] sm:$0xf]
    %v2322 = vld [vmem:[%s5 + $0xcc] sm:$0xf]
    %v2323 = vld [vmem:[%s5 + $0xd0] sm:$0xf]
    %v2324 = vld [vmem:[%s5 + $0xd4] sm:$0xf]
    %v2325 = vld [vmem:[%s5 + $0xd8] sm:$0xf]
    %v2326 = vld [vmem:[%s5 + $0xdc] sm:$0xf]
    %v2327 = vld [vmem:[%s5 + $0xe0] sm:$0xf]
    %v2328 = vld [vmem:[%s5 + $0xe4] sm:$0xf]
    %v2329 = vld [vmem:[%s5 + $0xe8] sm:$0xf]
    %v2330 = vld [vmem:[%s5 + $0xec] sm:$0xf]
    %v2331 = vld [vmem:[%s5 + $0xf0] sm:$0xf]
    %v2332 = vld [vmem:[%s5 + $0xf4] sm:$0xf]
    %v2333 = vld [vmem:[%s5 + $0xf8] sm:$0xf]
    %v2334 = vld [vmem:[%s5 + $0xfc] sm:$0xf]
    %v2335 = vld [vmem:[#allocation4] sm:$0x1]
    %v2337 = vperm.slane %v2335, 0
    %v2403 = vunpack.c.l.b16 %v2271
    %v2404 = vunpack.c.l.b16 %v2272
    %v2405 = vunpack.c.l.b16 %v2273
    %v2406 = vunpack.c.l.b16 %v2274
    %v2407 = vunpack.c.l.b16 %v2275
    %v2408 = vunpack.c.l.b16 %v2276
    %v2409 = vunpack.c.l.b16 %v2277
    %v2410 = vunpack.c.l.b16 %v2278
    %v2411 = vunpack.c.l.b16 %v2279
    %v2412 = vunpack.c.l.b16 %v2280
    %v2413 = vunpack.c.l.b16 %v2281
    %v2414 = vunpack.c.l.b16 %v2282
    %v2415 = vunpack.c.l.b16 %v2283
    %v2416 = vunpack.c.l.b16 %v2284
    %v2417 = vunpack.c.l.b16 %v2285
    %v2418 = vunpack.c.l.b16 %v2286
    %v2419 = vunpack.c.l.b16 %v2287
    %v2420 = vunpack.c.l.b16 %v2288
    %v2421 = vunpack.c.l.b16 %v2289
    %v2422 = vunpack.c.l.b16 %v2290
    %v2423 = vunpack.c.l.b16 %v2291
    %v2424 = vunpack.c.l.b16 %v2292
    %v2425 = vunpack.c.l.b16 %v2293
    %v2426 = vunpack.c.l.b16 %v2294
    %v2427 = vunpack.c.l.b16 %v2295
    %v2428 = vunpack.c.l.b16 %v2296
    %v2429 = vunpack.c.l.b16 %v2297
    %v2430 = vunpack.c.l.b16 %v2298
    %v2431 = vunpack.c.l.b16 %v2299
    %v2432 = vunpack.c.l.b16 %v2300
    %v2433 = vunpack.c.l.b16 %v2301
    %v2434 = vunpack.c.l.b16 %v2302
    %v2435 = vunpack.c.l.b16 %v2303
    %v2436 = vunpack.c.l.b16 %v2304
    %v2437 = vunpack.c.l.b16 %v2305
    %v2438 = vunpack.c.l.b16 %v2306
    %v2439 = vunpack.c.l.b16 %v2307
    %v2440 = vunpack.c.l.b16 %v2308
    %v2441 = vunpack.c.l.b16 %v2309
    %v2442 = vunpack.c.l.b16 %v2310
    %v2443 = vunpack.c.l.b16 %v2311
    %v2444 = vunpack.c.l.b16 %v2312
    %v2445 = vunpack.c.l.b16 %v2313
    %v2446 = vunpack.c.l.b16 %v2314
    %v2447 = vunpack.c.l.b16 %v2315
    %v2448 = vunpack.c.l.b16 %v2316
    %v2449 = vunpack.c.l.b16 %v2317
    %v2450 = vunpack.c.l.b16 %v2318
    %v2451 = vunpack.c.l.b16 %v2319
    %v2452 = vunpack.c.l.b16 %v2320
    %v2453 = vunpack.c.l.b16 %v2321
    %v2454 = vunpack.c.l.b16 %v2322
    %v2455 = vunpack.c.l.b16 %v2323
    %v2456 = vunpack.c.l.b16 %v2324
    %v2457 = vunpack.c.l.b16 %v2325
    %v2458 = vunpack.c.l.b16 %v2326
    %v2459 = vunpack.c.l.b16 %v2327
    %v2460 = vunpack.c.l.b16 %v2328
    %v2461 = vunpack.c.l.b16 %v2329
    %v2462 = vunpack.c.l.b16 %v2330
    %v2463 = vunpack.c.l.b16 %v2331
    %v2464 = vunpack.c.l.b16 %v2332
    %v2465 = vunpack.c.l.b16 %v2333
    %v2466 = vunpack.c.l.b16 %v2334
    %v2467 = vpack.c.b16 %v2404, %v2403
    %v2468 = vpack.c.b16 %v2406, %v2405
    %v2469 = vpack.c.b16 %v2408, %v2407
    %v2470 = vpack.c.b16 %v2410, %v2409
    %v2471 = vpack.c.b16 %v2412, %v2411
    %v2472 = vpack.c.b16 %v2414, %v2413
    %v2473 = vpack.c.b16 %v2416, %v2415
    %v2474 = vpack.c.b16 %v2418, %v2417
    %v2475 = vpack.c.b16 %v2420, %v2419
    %v2476 = vpack.c.b16 %v2422, %v2421
    %v2477 = vpack.c.b16 %v2424, %v2423
    %v2478 = vpack.c.b16 %v2426, %v2425
    %v2479 = vpack.c.b16 %v2428, %v2427
    %v2480 = vpack.c.b16 %v2430, %v2429
    %v2481 = vpack.c.b16 %v2432, %v2431
    %v2482 = vpack.c.b16 %v2434, %v2433
    %v2483 = vpack.c.b16 %v2436, %v2435
    %v2484 = vpack.c.b16 %v2438, %v2437
    %v2485 = vpack.c.b16 %v2440, %v2439
    %v2486 = vpack.c.b16 %v2442, %v2441
    %v2487 = vpack.c.b16 %v2444, %v2443
    %v2488 = vpack.c.b16 %v2446, %v2445
    %v2489 = vpack.c.b16 %v2448, %v2447
    %v2490 = vpack.c.b16 %v2450, %v2449
    %v2491 = vpack.c.b16 %v2452, %v2451
    %v2492 = vpack.c.b16 %v2454, %v2453
    %v2493 = vpack.c.b16 %v2456, %v2455
    %v2494 = vpack.c.b16 %v2458, %v2457
    %v2495 = vpack.c.b16 %v2460, %v2459
    %v2496 = vpack.c.b16 %v2462, %v2461
    %v2497 = vpack.c.b16 %v2464, %v2463
    %v2498 = vpack.c.b16 %v2466, %v2465
    %2531 = vmatpush.bf16.msra.mxu0 %v2474
    %2532 = vmatpush.bf16.msra.mxu0 %v2473
    %2533 = vmatpush.bf16.msra.mxu0 %v2472
    %2534 = vmatpush.bf16.msra.mxu0 %v2471
    %2535 = vmatpush.bf16.msra.mxu0 %v2470
    %2536 = vmatpush.bf16.msra.mxu0 %v2469
    %2537 = vmatpush.bf16.msra.mxu0 %v2468
    %2538 = vmatpush.bf16.msra.mxu0 %v2467
    %2539 = vmatmul.bf16.gmra.mxu0 %v2267
    %v2540 = vpop.f32.mrf.mxu0
    %v2541 = vadd.f32 %v2337, %v2540
    %v2542 = vpop.f32.mrf.mxu0
    %2543 = vdwg.mxu0
    %2544 = vmatpush.bf16.msra.mxu0 %v2482
    %2545 = vmatpush.bf16.msra.mxu0 %v2481
    %2546 = vmatpush.bf16.msra.mxu0 %v2480
    %2547 = vmatpush.bf16.msra.mxu0 %v2479
    %2548 = vmatpush.bf16.msra.mxu0 %v2478
    %2549 = vmatpush.bf16.msra.mxu0 %v2477
    %2550 = vmatpush.bf16.msra.mxu0 %v2476
    %2551 = vmatpush.bf16.msra.mxu0 %v2475
    %2552 = vmatmul.bf16.gmra.mxu0 %v2268
    %v2553 = vpop.f32.mrf.mxu0
    %v2554 = vadd.f32 %v2541, %v2553
    %v2555 = vpop.f32.mrf.mxu0
    %2556 = vdwg.mxu0
    %2557 = vmatpush.bf16.msra.mxu0 %v2490
    %2558 = vmatpush.bf16.msra.mxu0 %v2489
    %2559 = vmatpush.bf16.msra.mxu0 %v2488
    %2560 = vmatpush.bf16.msra.mxu0 %v2487
    %2561 = vmatpush.bf16.msra.mxu0 %v2486
    %2562 = vmatpush.bf16.msra.mxu0 %v2485
    %2563 = vmatpush.bf16.msra.mxu0 %v2484
    %2564 = vmatpush.bf16.msra.mxu0 %v2483
    %2565 = vmatmul.bf16.gmra.mxu0 %v2269
    %v2566 = vpop.f32.mrf.mxu0
    %v2567 = vadd.f32 %v2554, %v2566
    %v2568 = vpop.f32.mrf.mxu0
    %2569 = vdwg.mxu0
    %2570 = vmatpush.bf16.msra.mxu0 %v2498
    %2571 = vmatpush.bf16.msra.mxu0 %v2497
    %2572 = vmatpush.bf16.msra.mxu0 %v2496
    %2573 = vmatpush.bf16.msra.mxu0 %v2495
    %2574 = vmatpush.bf16.msra.mxu0 %v2494
    %2575 = vmatpush.bf16.msra.mxu0 %v2493
    %2576 = vmatpush.bf16.msra.mxu0 %v2492
    %2577 = vmatpush.bf16.msra.mxu0 %v2491
    %2578 = vmatmul.bf16.gmra.mxu0 %v2270
    %v2579 = vpop.f32.mrf.mxu0
    %v2580 = vadd.f32 %v2567, %v2579
    %v2581 = vpop.f32.mrf.mxu0
    %2582 = vdwg.mxu0
    %v2583 = vmax.f32 %v2580, 0.0
    %v2584 = vpack.c.bf16 %v2583, %v2583
    %v2585 = vld [vmem:[%s7] sm:$0xf]
    %v2586 = vld [vmem:[%s7 + $0x4] sm:$0xf]
    %v2587 = vld [vmem:[%s7 + $0x8] sm:$0xf]
    %v2588 = vld [vmem:[%s7 + $0xc] sm:$0xf]
    %v2589 = vld [vmem:[%s7 + $0x10] sm:$0xf]
    %v2590 = vld [vmem:[%s7 + $0x14] sm:$0xf]
    %v2591 = vld [vmem:[%s7 + $0x18] sm:$0xf]
    %v2592 = vld [vmem:[%s7 + $0x1c] sm:$0xf]
    %v2593 = vld [vmem:[%s7 + $0x20] sm:$0xf]
    %v2594 = vld [vmem:[%s7 + $0x24] sm:$0xf]
    %v2595 = vld [vmem:[%s7 + $0x28] sm:$0xf]
    %v2596 = vld [vmem:[%s7 + $0x2c] sm:$0xf]
    %v2597 = vld [vmem:[%s7 + $0x30] sm:$0xf]
    %v2598 = vld [vmem:[%s7 + $0x34] sm:$0xf]
    %v2599 = vld [vmem:[%s7 + $0x38] sm:$0xf]
    %v2600 = vld [vmem:[%s7 + $0x3c] sm:$0xf]
    %v2601 = vld [vmem:[#allocation6] sm:$0x1]
    %v2603 = vperm.slane %v2601, 0
    %v2621 = vunpack.c.l.b16 %v2585
    %v2622 = vunpack.c.l.b16 %v2586
    %v2623 = vunpack.c.l.b16 %v2587
    %v2624 = vunpack.c.l.b16 %v2588
    %v2625 = vunpack.c.l.b16 %v2589
    %v2626 = vunpack.c.l.b16 %v2590
    %v2627 = vunpack.c.l.b16 %v2591
    %v2628 = vunpack.c.l.b16 %v2592
    %v2629 = vunpack.c.l.b16 %v2593
    %v2630 = vunpack.c.l.b16 %v2594
    %v2631 = vunpack.c.l.b16 %v2595
    %v2632 = vunpack.c.l.b16 %v2596
    %v2633 = vunpack.c.l.b16 %v2597
    %v2634 = vunpack.c.l.b16 %v2598
    %v2635 = vunpack.c.l.b16 %v2599
    %v2636 = vunpack.c.l.b16 %v2600
    %v2637 = vpack.c.b16 %v2622, %v2621
    %v2638 = vpack.c.b16 %v2624, %v2623
    %v2639 = vpack.c.b16 %v2626, %v2625
    %v2640 = vpack.c.b16 %v2628, %v2627
    %v2641 = vpack.c.b16 %v2630, %v2629
    %v2642 = vpack.c.b16 %v2632, %v2631
    %v2643 = vpack.c.b16 %v2634, %v2633
    %v2644 = vpack.c.b16 %v2636, %v2635
    %2653 = vmatpush.bf16.msra.mxu0 %v2644
    %2654 = vmatpush.bf16.msra.mxu0 %v2643
    %2655 = vmatpush.bf16.msra.mxu0 %v2642
    %2656 = vmatpush.bf16.msra.mxu0 %v2641
    %2657 = vmatpush.bf16.msra.mxu0 %v2640
    %2658 = vmatpush.bf16.msra.mxu0 %v2639
    %2659 = vmatpush.bf16.msra.mxu0 %v2638
    %2660 = vmatpush.bf16.msra.mxu0 %v2637
    %2661 = vmatmul.bf16.gmra.mxu0 %v2584
    %v2662 = vpop.f32.mrf.mxu0
    %v2663 = vadd.f32 %v2603, %v2662
    %v2664 = vpop.f32.mrf.mxu0
    %2665 = vdwg.mxu0
    %2666 = vmax.xlane.f32.xlu0 %v2663
    %v2667 = vpop.xlane.xlu0 %2666
    %v2668 = vsub.f32 %v2663, %v2667
    %v2669 = vmul.f32 %v2668, 1.442695
    %v2670 = vpow.pop %v2669
    %2671 = vadd.xlane.f32.xlu0 %v2670
    %v2672 = vpop.xlane.xlu0 %2671
    %v2673 = vlog2.pop %v2672
    %v2674 = vmul.f32 %v2673, 0.6931472
    %v2675 = vsub.f32 %v2668, %v2674
    %2676 = vst [vmem:[%s9] sm:$0xff] %v2675
    // Predicated region
    $region50: #{cnn_mnist_forward.1} parent=1 // pred_check
      _
    $region51: #{cnn_mnist_forward.1} parent=1 // pred_check_branch
      %2678 = sbr.rel (0) target = $region53
    $region52: #{cnn_mnist_forward.1} parent=1 // pred_region
      _
    $region53: #{cnn_mnist_forward.1} parent=1 // pred_fallthru
      _
    // Predicated region
    $region54: #{cnn_mnist_forward.1} parent=1 // pred_check
      _
    $region55: #{cnn_mnist_forward.1} parent=1 // pred_check_branch
      %2680 = sbr.rel (0) target = $region57
    $region56: #{cnn_mnist_forward.1} parent=1 // pred_region
      _
    $region57: #{cnn_mnist_forward.1} parent=1 // pred_fallthru
      _
    %2681 = vsyncpa [#allocation3], 1
    %2682 = vsyncpa [#allocation5], 1

</llo_original>
